<compile_context>
chip_gen: v7x
topology: tpu7x:2x2x1
jax: 0.10.0
libtpu: 0.0.40
codegen_flags: <defaults>
</compile_context>

<pallas_src>
import jax
import jax.numpy as jnp
from jax.experimental import pallas as pl
from jax.experimental.pallas import tpu as pltpu

LANE = 128
_VMEM_LIMIT = 32 * 1024 * 1024  # above default scoped limit, below physical on all chips


def _round_up(x, m):
    return (x + m - 1) // m * m


# ---------------------------------------------------------------------------
# Pallas kernels
# ---------------------------------------------------------------------------
def _matmul_bias_act_kernel(apply_relu):
    def kernel(x_ref, w_ref, b_ref, o_ref):
        acc = jnp.dot(x_ref[...], w_ref[...], preferred_element_type=jnp.float32)
        acc = acc + b_ref[...]
        if apply_relu:
            acc = jnp.maximum(acc, 0.0)
        o_ref[...] = acc.astype(o_ref.dtype)
    return kernel


def pallas_matmul_bias_act(x, w, b, *, relu, out_dtype, tile_m=512):
    """y = act(x @ w + b).

    x: (N, K) bf16, w: (K, Mp) bf16 with Mp a multiple of 128 (lane-dense
    output), b: (1, Mp) f32.  The row dimension is tiled with a parallel grid
    (auto double-buffered HBM<->VMEM pipelining, scales with batch, megacore
    splits rows on v7x).
    """
    N, K = x.shape
    Mp = w.shape[1]
    assert Mp % LANE == 0

    tile = min(tile_m, _round_up(N, 8))
    n_pad = _round_up(N, tile)
    if n_pad != N:
        x = jnp.pad(x, ((0, n_pad - N), (0, 0)))
    grid = (n_pad // tile,)

    flops = 2 * n_pad * K * Mp
    bytes_accessed = (n_pad * K * x.dtype.itemsize + K * Mp * w.dtype.itemsize
                      + Mp * 4 + n_pad * Mp * jnp.dtype(out_dtype).itemsize)

    out = pl.pallas_call(
        _matmul_bias_act_kernel(relu),
        out_shape=jax.ShapeDtypeStruct((n_pad, Mp), out_dtype),
        grid=grid,
        in_specs=[
            pl.BlockSpec((tile, K), lambda i: (i, 0)),
            pl.BlockSpec((K, Mp), lambda i: (0, 0)),
            pl.BlockSpec((1, Mp), lambda i: (0, 0)),
        ],
        out_specs=pl.BlockSpec((tile, Mp), lambda i: (i, 0)),
        compiler_params=pltpu.CompilerParams(
            dimension_semantics=("parallel",),
            vmem_limit_bytes=_VMEM_LIMIT,
        ),
        cost_estimate=pl.CostEstimate(flops=flops, transcendentals=0,
                                      bytes_accessed=bytes_accessed),
    )(x, w, b)
    if n_pad != N:
        out = out[:N]
    return out


def _fc_fused_kernel(x_ref, w1_ref, b1_ref, w2_ref, b2_ref, w3_ref, b3_ref, o_ref):
    h = jnp.dot(x_ref[...], w1_ref[...], preferred_element_type=jnp.float32) + b1_ref[...]
    h = jnp.maximum(h, 0.0).astype(w2_ref.dtype)
    h = jnp.dot(h, w2_ref[...], preferred_element_type=jnp.float32) + b2_ref[...]
    h = jnp.maximum(h, 0.0).astype(w3_ref.dtype)
    o = jnp.dot(h, w3_ref[...], preferred_element_type=jnp.float32) + b3_ref[...]
    o_ref[...] = o.astype(o_ref.dtype)


def pallas_fc_head(x, w1, b1, w2, b2, w3, b3, *, tile_m=512):
    """Fused fc1+ReLU -> fc2+ReLU -> fc3 in one pallas_call (no HBM round trips
    for the tiny (B,120)/(B,84) intermediates)."""
    N, K = x.shape
    M1, M2, M3 = w1.shape[1], w2.shape[1], w3.shape[1]
    tile = min(tile_m, _round_up(N, 8))
    n_pad = _round_up(N, tile)
    if n_pad != N:
        x = jnp.pad(x, ((0, n_pad - N), (0, 0)))
    grid = (n_pad // tile,)
    out = pl.pallas_call(
        _fc_fused_kernel,
        out_shape=jax.ShapeDtypeStruct((n_pad, M3), jnp.float32),
        grid=grid,
        in_specs=[
            pl.BlockSpec((tile, K), lambda i: (i, 0)),
            pl.BlockSpec((K, M1), lambda i: (0, 0)),
            pl.BlockSpec((1, M1), lambda i: (0, 0)),
            pl.BlockSpec((M1, M2), lambda i: (0, 0)),
            pl.BlockSpec((1, M2), lambda i: (0, 0)),
            pl.BlockSpec((M2, M3), lambda i: (0, 0)),
            pl.BlockSpec((1, M3), lambda i: (0, 0)),
        ],
        out_specs=pl.BlockSpec((tile, M3), lambda i: (i, 0)),
        compiler_params=pltpu.CompilerParams(
            dimension_semantics=("parallel",),
            vmem_limit_bytes=_VMEM_LIMIT,
        ),
    )(x, w1, b1, w2, b2, w3, b3)
    if n_pad != N:
        out = out[:N]
    return out


def _maxpool2x2_kernel(x_ref, o_ref):
    # x_ref: (1, Ho, 2, Wo, 2*C)   o_ref: (1, Ho, Wo, C)
    c = o_ref.shape[-1]
    x = x_ref[...]
    v = jnp.maximum(x[:, :, 0], x[:, :, 1])           # max over the row pair
    o_ref[...] = jnp.maximum(v[..., :c], v[..., c:])  # max over the column pair (lane slice)


def pallas_maxpool2x2(x):
    """2x2 max pool (stride 2) on NHWC with C a multiple of 128 (lane dense).

    The input reshape is a pure row-major split/merge (free in XLA), so the
    conv output is read from HBM exactly once by a single kernel.
    """
    B, H, W, C = x.shape
    assert H % 2 == 0 and W % 2 == 0 and C % LANE == 0
    Ho, Wo = H // 2, W // 2
    xr = x.reshape(B, Ho, 2, Wo, 2 * C)
    return pl.pallas_call(
        _maxpool2x2_kernel,
        out_shape=jax.ShapeDtypeStruct((B, Ho, Wo, C), x.dtype),
        grid=(B,),
        in_specs=[pl.BlockSpec((1, Ho, 2, Wo, 2 * C), lambda b: (b, 0, 0, 0, 0))],
        out_specs=pl.BlockSpec((1, Ho, Wo, C), lambda b: (b, 0, 0, 0)),
        compiler_params=pltpu.CompilerParams(
            dimension_semantics=("parallel",),
            vmem_limit_bytes=_VMEM_LIMIT,
        ),
    )(xr)


# ---------------------------------------------------------------------------
# Glue: im2col (feature order (kh, kw, cin)) and weight / padding helpers
# ---------------------------------------------------------------------------
def im2col_khkwc(x, k):
    """x: (B,H,W,C) -> (B, Ho, Wo, k*k*C); feature order (kh, kw, cin)."""
    B, H, W, C = x.shape
    Ho, Wo = H - k + 1, W - k + 1
    taps = [x[:, kh:kh + Ho, kw:kw + Wo, :] for kh in range(k) for kw in range(k)]
    return jnp.concatenate(taps, axis=-1)


def _pad_lanes(a):
    """Zero-pad the last dim of a 2-D array up to a multiple of 128."""
    n = a.shape[-1]
    pad = _round_up(n, LANE) - n
    if pad:
        a = jnp.pad(a, ((0, 0), (0, pad)))
    return a


def _pad2d(a, rows, cols):
    return jnp.pad(a, ((0, rows - a.shape[0]), (0, cols - a.shape[1])))


def _conv_weight_mat(w, dtype):
    """torch (Cout,Cin,kh,kw) -> ((kh kw cin), Cout zero-padded to 128 lanes)."""
    cout = w.shape[0]
    wm = jnp.transpose(w, (2, 3, 1, 0)).reshape(-1, cout)
    return _pad_lanes(wm).astype(dtype)


# ---------------------------------------------------------------------------
# Parameter init (deterministic, synthetic; shapes follow TrashNet.__init__)
# ---------------------------------------------------------------------------
def init_params(classes, key):
    keys = jax.random.split(key, 10)

    def u(k, shape, fan_in):
        bound = 1.0 / jnp.sqrt(fan_in)
        return jax.random.uniform(k, shape, jnp.float32, -bound, bound)

    return {
        "conv1_w": u(keys[0], (6, 3, 5, 5), 3 * 5 * 5),
        "conv1_b": u(keys[1], (6,), 3 * 5 * 5),
        "conv2_w": u(keys[2], (16, 6, 5, 5), 6 * 5 * 5),
        "conv2_b": u(keys[3], (16,), 6 * 5 * 5),
        "fc1_w": u(keys[4], (16 * 5 * 5, 120), 16 * 5 * 5),   # stored (in, out)
        "fc1_b": u(keys[5], (120,), 16 * 5 * 5),
        "fc2_w": u(keys[6], (120, 84), 120),
        "fc2_b": u(keys[7], (84,), 120),
        "fc3_w": u(keys[8], (84, classes), 84),
        "fc3_b": u(keys[9], (classes,), 84),
    }


# ---------------------------------------------------------------------------
# Forward pass
# ---------------------------------------------------------------------------
def trashnet_forward(x_nchw, params):
    B = x_nchw.shape[0]
    cdt = jnp.bfloat16  # MXU operand dtype; accumulation / bias / ReLU stay f32

    x = jnp.transpose(x_nchw, (0, 2, 3, 1))            # NCHW -> NHWC, (B,32,32,3)

    # conv1 (3 -> 6, 5x5, valid) + ReLU : row-tiled matmul, 128-lane output
    p = im2col_khkwc(x, 5)                             # (B,28,28,75)
    _, H1, W1, K1 = p.shape
    w1 = _conv_weight_mat(params["conv1_w"], cdt)      # (75,128)
    b1 = _pad_lanes(params["conv1_b"].reshape(1, -1)).astype(jnp.float32)
    h = pallas_matmul_bias_act(p.reshape(B * H1 * W1, K1).astype(cdt), w1, b1,
                               relu=True, out_dtype=cdt)
    h = h.reshape(B, H1, W1, LANE)                     # padded channels are exact zeros

    # max_pool2d(2)
    h = pallas_maxpool2x2(h)                           # (B,14,14,128)

    # conv2 (6 -> 16, 5x5, valid) + ReLU
    h = h[..., :6]                                     # drop zero-padded channels
    p = im2col_khkwc(h, 5)                             # (B,10,10,150)
    _, H2, W2, K2 = p.shape
    w2 = _conv_weight_mat(params["conv2_w"], cdt)      # (150,128)
    b2 = _pad_lanes(params["conv2_b"].reshape(1, -1)).astype(jnp.float32)
    h = pallas_matmul_bias_act(p.reshape(B * H2 * W2, K2).astype(cdt), w2, b2,
                               relu=True, out_dtype=cdt)
    h = h.reshape(B, H2, W2, LANE)

    # max_pool2d(2)
    h = pallas_maxpool2x2(h)                           # (B,5,5,128)

    # flatten exactly like torch: out.view(B,-1) on NCHW (B,16,5,5)
    h = h[..., :16]
    h = jnp.transpose(h, (0, 3, 1, 2)).reshape(B, 16 * 5 * 5).astype(cdt)

    # fused fc1+ReLU -> fc2+ReLU -> fc3 (single pallas_call, lane-padded widths)
    classes = params["fc3_b"].shape[0]
    fw1 = _pad_lanes(params["fc1_w"]).astype(cdt)                          # (400,128)
    fb1 = _pad_lanes(params["fc1_b"].reshape(1, -1)).astype(jnp.float32)
    fw2 = _pad2d(params["fc2_w"], LANE, LANE).astype(cdt)                  # (128,128)
    fb2 = _pad_lanes(params["fc2_b"].reshape(1, -1)).astype(jnp.float32)
    fw3 = _pad2d(params["fc3_w"], LANE, _round_up(classes, LANE)).astype(cdt)
    fb3 = _pad_lanes(params["fc3_b"].reshape(1, -1)).astype(jnp.float32)
    out = pallas_fc_head(h, fw1, fb1, fw2, fb2, fw3, fb3)                  # (B,128) f32
    return out[:, :classes]


if __name__ == "__main__":
    classes = 6
    key = jax.random.PRNGKey(0)
    k_x, k_p = jax.random.split(key)

    # Input must be (B, 3, 32, 32) so fc1's 16*5*5 flatten matches the module.
    x = jax.random.normal(k_x, (2, 3, 32, 32), jnp.float32)
    params = init_params(classes, k_p)

    fwd = jax.jit(trashnet_forward)
    out = fwd(x, params)
    jax.block_until_ready(out)

    assert out.shape == (2, classes), out.shape
    assert out.dtype == jnp.float32
    print("KERNEL_OK")
</pallas_src>

<mosaic_0001>
module attributes {stable_mosaic.version = 11 : i64} {
  func.func @kernel(%arg0: i32, %arg1: memref<512x75xbf16, #tpu.memory_space<vmem>>, %arg2: memref<75x128xbf16, #tpu.memory_space<vmem>>, %arg3: memref<1x128xf32, #tpu.memory_space<vmem>>, %arg4: memref<512x128xbf16, #tpu.memory_space<vmem>>) attributes {dimension_semantics = [#tpu.dimension_semantics<parallel>], iteration_bounds = array<i64: 4>, scalar_prefetch = 0 : i64, scratch_operands = 0 : i64, tpu.core_type = #tpu.core_type<tc>, window_params = [{transform_indices = @transform_0, window_bounds = array<i64: 512, 75>}, {pipeline_mode = #tpu.pipeline_mode<synchronous>, transform_indices = @transform_1, window_bounds = array<i64: 75, 128>}, {pipeline_mode = #tpu.pipeline_mode<synchronous>, transform_indices = @transform_2, window_bounds = array<i64: 1, 128>}, {transform_indices = @transform_3, window_bounds = array<i64: 512, 128>}]} {
    %c0 = arith.constant 0 : index
    %c0_0 = arith.constant 0 : index
    %0 = vector.load %arg1[%c0, %c0_0] : memref<512x75xbf16, #tpu.memory_space<vmem>>, vector<512x75xbf16>
    %c0_1 = arith.constant 0 : index
    %c0_2 = arith.constant 0 : index
    %1 = vector.load %arg2[%c0_1, %c0_2] : memref<75x128xbf16, #tpu.memory_space<vmem>>, vector<75x128xbf16>
    %cst = arith.constant dense<0.000000e+00> : vector<512x128xf32>
    %2 = tpu.matmul %0, %1, %cst {dimension_numbers = #tpu.dot_dimension_numbers<[1], [0], [0], [1], [0, 0, 1, 1], [], []>} : vector<512x75xbf16>, vector<75x128xbf16>, vector<512x128xf32> -> vector<512x128xf32>
    %c0_3 = arith.constant 0 : index
    %c0_4 = arith.constant 0 : index
    %3 = vector.load %arg3[%c0_3, %c0_4] : memref<1x128xf32, #tpu.memory_space<vmem>>, vector<1x128xf32>
    %4 = vector.broadcast %3 : vector<1x128xf32> to vector<512x128xf32>
    %5 = arith.addf %2, %4 : vector<512x128xf32>
    %cst_5 = arith.constant 0.000000e+00 : f32
    %6 = vector.broadcast %cst_5 : f32 to vector<512x128xf32>
    %7 = arith.maximumf %5, %6 : vector<512x128xf32>
    %8 = arith.truncf %7 : vector<512x128xf32> to vector<512x128xbf16>
    %c0_6 = arith.constant 0 : index
    %c0_7 = arith.constant 0 : index
    %9 = vector.load %arg4[%c0_6, %c0_7] : memref<512x128xbf16, #tpu.memory_space<vmem>>, vector<512x128xbf16>
    tpu.vector_store %arg4[%c0_6, %c0_7], %8 {strides = array<i32>} : memref<512x128xbf16, #tpu.memory_space<vmem>>, vector<512x128xbf16>,
    return
  }
  func.func @transform_0(%arg0: i32) -> (i32, i32) {
    %c0_i32 = arith.constant 0 : i32
    %c0_i32_0 = arith.constant 0 : i32
    return %arg0, %c0_i32 : i32, i32
  }
  func.func @transform_1(%arg0: i32) -> (i32, i32) {
    %c0_i32 = arith.constant 0 : i32
    %c0_i32_0 = arith.constant 0 : i32
    %c0_i32_1 = arith.constant 0 : i32
    return %c0_i32, %c0_i32_0 : i32, i32
  }
  func.func @transform_2(%arg0: i32) -> (i32, i32) {
    %c0_i32 = arith.constant 0 : i32
    %c0_i32_0 = arith.constant 0 : i32
    %c0_i32_1 = arith.constant 0 : i32
    return %c0_i32, %c0_i32_0 : i32, i32
  }
  func.func @transform_3(%arg0: i32) -> (i32, i32) {
    %c0_i32 = arith.constant 0 : i32
    %c0_i32_0 = arith.constant 0 : i32
    return %arg0, %c0_i32 : i32, i32
  }
}

module attributes {stable_mosaic.version = 11 : i64} {
  func.func @_maxpool2x2_kernel(%arg0: i32, %arg1: memref<1x14x2x14x256xbf16, #tpu.memory_space<vmem>>, %arg2: memref<1x14x14x128xbf16, #tpu.memory_space<vmem>>) attributes {dimension_semantics = [#tpu.dimension_semantics<parallel>], iteration_bounds = array<i64: 2>, scalar_prefetch = 0 : i64, scratch_operands = 0 : i64, tpu.core_type = #tpu.core_type<tc>, window_params = [{transform_indices = @transform_0, window_bounds = array<i64: 1, 14, 2, 14, 256>}, {transform_indices = @transform_1, window_bounds = array<i64: 1, 14, 14, 128>}]} {
    %c0 = arith.constant 0 : index
    %c0_0 = arith.constant 0 : index
    %c0_1 = arith.constant 0 : index
    %c0_2 = arith.constant 0 : index
    %c0_3 = arith.constant 0 : index
    %0 = vector.load %arg1[%c0, %c0_0, %c0_1, %c0_2, %c0_3] : memref<1x14x2x14x256xbf16, #tpu.memory_space<vmem>>, vector<1x14x2x14x256xbf16>
    %1 = vector.extract_strided_slice %0 {offsets = [0, 0, 0, 0, 0], sizes = [1, 14, 1, 14, 256], strides = [1, 1, 1, 1, 1]} : vector<1x14x2x14x256xbf16> to vector<1x14x1x14x256xbf16>
    %2 = vector.shape_cast %1 : vector<1x14x1x14x256xbf16> to vector<1x14x14x256xbf16>
    %3 = vector.extract_strided_slice %0 {offsets = [0, 0, 1, 0, 0], sizes = [1, 14, 1, 14, 256], strides = [1, 1, 1, 1, 1]} : vector<1x14x2x14x256xbf16> to vector<1x14x1x14x256xbf16>
    %4 = vector.shape_cast %3 : vector<1x14x1x14x256xbf16> to vector<1x14x14x256xbf16>
    %5 = arith.maximumf %2, %4 : vector<1x14x14x256xbf16>
    %6 = vector.extract_strided_slice %5 {offsets = [0, 0, 0, 0], sizes = [1, 14, 14, 128], strides = [1, 1, 1, 1]} : vector<1x14x14x256xbf16> to vector<1x14x14x128xbf16>
    %7 = vector.extract_strided_slice %5 {offsets = [0, 0, 0, 128], sizes = [1, 14, 14, 128], strides = [1, 1, 1, 1]} : vector<1x14x14x256xbf16> to vector<1x14x14x128xbf16>
    %8 = arith.maximumf %6, %7 : vector<1x14x14x128xbf16>
    %c0_4 = arith.constant 0 : index
    %c0_5 = arith.constant 0 : index
    %c0_6 = arith.constant 0 : index
    %c0_7 = arith.constant 0 : index
    %9 = vector.load %arg2[%c0_4, %c0_5, %c0_6, %c0_7] : memref<1x14x14x128xbf16, #tpu.memory_space<vmem>>, vector<1x14x14x128xbf16>
    tpu.vector_store %arg2[%c0_4, %c0_5, %c0_6, %c0_7], %8 {strides = array<i32>} : memref<1x14x14x128xbf16, #tpu.memory_space<vmem>>, vector<1x14x14x128xbf16>,
    return
  }
  func.func @transform_0(%arg0: i32) -> (i32, i32, i32, i32, i32) {
    %c0_i32 = arith.constant 0 : i32
    %c0_i32_0 = arith.constant 0 : i32
    %c0_i32_1 = arith.constant 0 : i32
    %c0_i32_2 = arith.constant 0 : i32
    %c0_i32_3 = arith.constant 0 : i32
    return %arg0, %c0_i32, %c0_i32_0, %c0_i32_1, %c0_i32_2 : i32, i32, i32, i32, i32
  }
  func.func @transform_1(%arg0: i32) -> (i32, i32, i32, i32) {
    %c0_i32 = arith.constant 0 : i32
    %c0_i32_0 = arith.constant 0 : i32
    %c0_i32_1 = arith.constant 0 : i32
    %c0_i32_2 = arith.constant 0 : i32
    return %arg0, %c0_i32, %c0_i32_0, %c0_i32_1 : i32, i32, i32, i32
  }
}

module attributes {stable_mosaic.version = 11 : i64} {
  func.func @kernel(%arg0: i32, %arg1: memref<200x150xbf16, #tpu.memory_space<vmem>>, %arg2: memref<150x128xbf16, #tpu.memory_space<vmem>>, %arg3: memref<1x128xf32, #tpu.memory_space<vmem>>, %arg4: memref<200x128xbf16, #tpu.memory_space<vmem>>) attributes {dimension_semantics = [#tpu.dimension_semantics<parallel>], iteration_bounds = array<i64: 1>, scalar_prefetch = 0 : i64, scratch_operands = 0 : i64, tpu.core_type = #tpu.core_type<tc>, window_params = [{transform_indices = @transform_0, window_bounds = array<i64: 200, 150>}, {pipeline_mode = #tpu.pipeline_mode<synchronous>, transform_indices = @transform_1, window_bounds = array<i64: 150, 128>}, {pipeline_mode = #tpu.pipeline_mode<synchronous>, transform_indices = @transform_2, window_bounds = array<i64: 1, 128>}, {transform_indices = @transform_3, window_bounds = array<i64: 200, 128>}]} {
    %c0 = arith.constant 0 : index
    %c0_0 = arith.constant 0 : index
    %0 = vector.load %arg1[%c0, %c0_0] : memref<200x150xbf16, #tpu.memory_space<vmem>>, vector<200x150xbf16>
    %c0_1 = arith.constant 0 : index
    %c0_2 = arith.constant 0 : index
    %1 = vector.load %arg2[%c0_1, %c0_2] : memref<150x128xbf16, #tpu.memory_space<vmem>>, vector<150x128xbf16>
    %cst = arith.constant dense<0.000000e+00> : vector<200x128xf32>
    %2 = tpu.matmul %0, %1, %cst {dimension_numbers = #tpu.dot_dimension_numbers<[1], [0], [0], [1], [0, 0, 1, 1], [], []>} : vector<200x150xbf16>, vector<150x128xbf16>, vector<200x128xf32> -> vector<200x128xf32>
    %c0_3 = arith.constant 0 : index
    %c0_4 = arith.constant 0 : index
    %3 = vector.load %arg3[%c0_3, %c0_4] : memref<1x128xf32, #tpu.memory_space<vmem>>, vector<1x128xf32>
    %4 = vector.broadcast %3 : vector<1x128xf32> to vector<200x128xf32>
    %5 = arith.addf %2, %4 : vector<200x128xf32>
    %cst_5 = arith.constant 0.000000e+00 : f32
    %6 = vector.broadcast %cst_5 : f32 to vector<200x128xf32>
    %7 = arith.maximumf %5, %6 : vector<200x128xf32>
    %8 = arith.truncf %7 : vector<200x128xf32> to vector<200x128xbf16>
    %c0_6 = arith.constant 0 : index
    %c0_7 = arith.constant 0 : index
    %9 = vector.load %arg4[%c0_6, %c0_7] : memref<200x128xbf16, #tpu.memory_space<vmem>>, vector<200x128xbf16>
    tpu.vector_store %arg4[%c0_6, %c0_7], %8 {strides = array<i32>} : memref<200x128xbf16, #tpu.memory_space<vmem>>, vector<200x128xbf16>,
    return
  }
  func.func @transform_0(%arg0: i32) -> (i32, i32) {
    %c0_i32 = arith.constant 0 : i32
    %c0_i32_0 = arith.constant 0 : i32
    return %arg0, %c0_i32 : i32, i32
  }
  func.func @transform_1(%arg0: i32) -> (i32, i32) {
    %c0_i32 = arith.constant 0 : i32
    %c0_i32_0 = arith.constant 0 : i32
    %c0_i32_1 = arith.constant 0 : i32
    return %c0_i32, %c0_i32_0 : i32, i32
  }
  func.func @transform_2(%arg0: i32) -> (i32, i32) {
    %c0_i32 = arith.constant 0 : i32
    %c0_i32_0 = arith.constant 0 : i32
    %c0_i32_1 = arith.constant 0 : i32
    return %c0_i32, %c0_i32_0 : i32, i32
  }
  func.func @transform_3(%arg0: i32) -> (i32, i32) {
    %c0_i32 = arith.constant 0 : i32
    %c0_i32_0 = arith.constant 0 : i32
    return %arg0, %c0_i32 : i32, i32
  }
}

module attributes {stable_mosaic.version = 11 : i64} {
  func.func @_maxpool2x2_kernel(%arg0: i32, %arg1: memref<1x5x2x5x256xbf16, #tpu.memory_space<vmem>>, %arg2: memref<1x5x5x128xbf16, #tpu.memory_space<vmem>>) attributes {dimension_semantics = [#tpu.dimension_semantics<parallel>], iteration_bounds = array<i64: 2>, scalar_prefetch = 0 : i64, scratch_operands = 0 : i64, tpu.core_type = #tpu.core_type<tc>, window_params = [{transform_indices = @transform_0, window_bounds = array<i64: 1, 5, 2, 5, 256>}, {transform_indices = @transform_1, window_bounds = array<i64: 1, 5, 5, 128>}]} {
    %c0 = arith.constant 0 : index
    %c0_0 = arith.constant 0 : index
    %c0_1 = arith.constant 0 : index
    %c0_2 = arith.constant 0 : index
    %c0_3 = arith.constant 0 : index
    %0 = vector.load %arg1[%c0, %c0_0, %c0_1, %c0_2, %c0_3] : memref<1x5x2x5x256xbf16, #tpu.memory_space<vmem>>, vector<1x5x2x5x256xbf16>
    %1 = vector.extract_strided_slice %0 {offsets = [0, 0, 0, 0, 0], sizes = [1, 5, 1, 5, 256], strides = [1, 1, 1, 1, 1]} : vector<1x5x2x5x256xbf16> to vector<1x5x1x5x256xbf16>
    %2 = vector.shape_cast %1 : vector<1x5x1x5x256xbf16> to vector<1x5x5x256xbf16>
    %3 = vector.extract_strided_slice %0 {offsets = [0, 0, 1, 0, 0], sizes = [1, 5, 1, 5, 256], strides = [1, 1, 1, 1, 1]} : vector<1x5x2x5x256xbf16> to vector<1x5x1x5x256xbf16>
    %4 = vector.shape_cast %3 : vector<1x5x1x5x256xbf16> to vector<1x5x5x256xbf16>
    %5 = arith.maximumf %2, %4 : vector<1x5x5x256xbf16>
    %6 = vector.extract_strided_slice %5 {offsets = [0, 0, 0, 0], sizes = [1, 5, 5, 128], strides = [1, 1, 1, 1]} : vector<1x5x5x256xbf16> to vector<1x5x5x128xbf16>
    %7 = vector.extract_strided_slice %5 {offsets = [0, 0, 0, 128], sizes = [1, 5, 5, 128], strides = [1, 1, 1, 1]} : vector<1x5x5x256xbf16> to vector<1x5x5x128xbf16>
    %8 = arith.maximumf %6, %7 : vector<1x5x5x128xbf16>
    %c0_4 = arith.constant 0 : index
    %c0_5 = arith.constant 0 : index
    %c0_6 = arith.constant 0 : index
    %c0_7 = arith.constant 0 : index
    %9 = vector.load %arg2[%c0_4, %c0_5, %c0_6, %c0_7] : memref<1x5x5x128xbf16, #tpu.memory_space<vmem>>, vector<1x5x5x128xbf16>
    tpu.vector_store %arg2[%c0_4, %c0_5, %c0_6, %c0_7], %8 {strides = array<i32>} : memref<1x5x5x128xbf16, #tpu.memory_space<vmem>>, vector<1x5x5x128xbf16>,
    return
  }
  func.func @transform_0(%arg0: i32) -> (i32, i32, i32, i32, i32) {
    %c0_i32 = arith.constant 0 : i32
    %c0_i32_0 = arith.constant 0 : i32
    %c0_i32_1 = arith.constant 0 : i32
    %c0_i32_2 = arith.constant 0 : i32
    %c0_i32_3 = arith.constant 0 : i32
    return %arg0, %c0_i32, %c0_i32_0, %c0_i32_1, %c0_i32_2 : i32, i32, i32, i32, i32
  }
  func.func @transform_1(%arg0: i32) -> (i32, i32, i32, i32) {
    %c0_i32 = arith.constant 0 : i32
    %c0_i32_0 = arith.constant 0 : i32
    %c0_i32_1 = arith.constant 0 : i32
    %c0_i32_2 = arith.constant 0 : i32
    return %arg0, %c0_i32, %c0_i32_0, %c0_i32_1 : i32, i32, i32, i32
  }
}

module attributes {stable_mosaic.version = 11 : i64} {
  func.func @_fc_fused_kernel(%arg0: i32, %arg1: memref<8x400xbf16, #tpu.memory_space<vmem>>, %arg2: memref<400x128xbf16, #tpu.memory_space<vmem>>, %arg3: memref<1x128xf32, #tpu.memory_space<vmem>>, %arg4: memref<128x128xbf16, #tpu.memory_space<vmem>>, %arg5: memref<1x128xf32, #tpu.memory_space<vmem>>, %arg6: memref<128x128xbf16, #tpu.memory_space<vmem>>, %arg7: memref<1x128xf32, #tpu.memory_space<vmem>>, %arg8: memref<8x128xf32, #tpu.memory_space<vmem>>) attributes {dimension_semantics = [#tpu.dimension_semantics<parallel>], iteration_bounds = array<i64: 1>, scalar_prefetch = 0 : i64, scratch_operands = 0 : i64, tpu.core_type = #tpu.core_type<tc>, window_params = [{transform_indices = @transform_0, window_bounds = array<i64: 8, 400>}, {pipeline_mode = #tpu.pipeline_mode<synchronous>, transform_indices = @transform_1, window_bounds = array<i64: 400, 128>}, {pipeline_mode = #tpu.pipeline_mode<synchronous>, transform_indices = @transform_2, window_bounds = array<i64: 1, 128>}, {pipeline_mode = #tpu.pipeline_mode<synchronous>, transform_indices = @transform_3, window_bounds = array<i64: 128, 128>}, {pipeline_mode = #tpu.pipeline_mode<synchronous>, transform_indices = @transform_4, window_bounds = array<i64: 1, 128>}, {pipeline_mode = #tpu.pipeline_mode<synchronous>, transform_indices = @transform_5, window_bounds = array<i64: 128, 128>}, {pipeline_mode = #tpu.pipeline_mode<synchronous>, transform_indices = @transform_6, window_bounds = array<i64: 1, 128>}, {transform_indices = @transform_7, window_bounds = array<i64: 8, 128>}]} {
    %c0 = arith.constant 0 : index
    %c0_0 = arith.constant 0 : index
    %0 = vector.load %arg1[%c0, %c0_0] : memref<8x400xbf16, #tpu.memory_space<vmem>>, vector<8x400xbf16>
    %c0_1 = arith.constant 0 : index
    %c0_2 = arith.constant 0 : index
    %1 = vector.load %arg2[%c0_1, %c0_2] : memref<400x128xbf16, #tpu.memory_space<vmem>>, vector<400x128xbf16>
    %cst = arith.constant dense<0.000000e+00> : vector<8x128xf32>
    %2 = tpu.matmul %0, %1, %cst {dimension_numbers = #tpu.dot_dimension_numbers<[1], [0], [0], [1], [0, 0, 1, 1], [], []>} : vector<8x400xbf16>, vector<400x128xbf16>, vector<8x128xf32> -> vector<8x128xf32>
    %c0_3 = arith.constant 0 : index
    %c0_4 = arith.constant 0 : index
    %3 = vector.load %arg3[%c0_3, %c0_4] : memref<1x128xf32, #tpu.memory_space<vmem>>, vector<1x128xf32>
    %4 = vector.broadcast %3 : vector<1x128xf32> to vector<8x128xf32>
    %5 = arith.addf %2, %4 : vector<8x128xf32>
    %cst_5 = arith.constant 0.000000e+00 : f32
    %6 = vector.broadcast %cst_5 : f32 to vector<8x128xf32>
    %7 = arith.maximumf %5, %6 : vector<8x128xf32>
    %8 = arith.truncf %7 : vector<8x128xf32> to vector<8x128xbf16>
    %c0_6 = arith.constant 0 : index
    %c0_7 = arith.constant 0 : index
    %9 = vector.load %arg4[%c0_6, %c0_7] : memref<128x128xbf16, #tpu.memory_space<vmem>>, vector<128x128xbf16>
    %cst_8 = arith.constant dense<0.000000e+00> : vector<8x128xf32>
    %10 = tpu.matmul %8, %9, %cst_8 {dimension_numbers = #tpu.dot_dimension_numbers<[1], [0], [0], [1], [0, 0, 1, 1], [], []>} : vector<8x128xbf16>, vector<128x128xbf16>, vector<8x128xf32> -> vector<8x128xf32>
    %c0_9 = arith.constant 0 : index
    %c0_10 = arith.constant 0 : index
    %11 = vector.load %arg5[%c0_9, %c0_10] : memref<1x128xf32, #tpu.memory_space<vmem>>, vector<1x128xf32>
    %12 = vector.broadcast %11 : vector<1x128xf32> to vector<8x128xf32>
    %13 = arith.addf %10, %12 : vector<8x128xf32>
    %cst_11 = arith.constant 0.000000e+00 : f32
    %14 = vector.broadcast %cst_11 : f32 to vector<8x128xf32>
    %15 = arith.maximumf %13, %14 : vector<8x128xf32>
    %16 = arith.truncf %15 : vector<8x128xf32> to vector<8x128xbf16>
    %c0_12 = arith.constant 0 : index
    %c0_13 = arith.constant 0 : index
    %17 = vector.load %arg6[%c0_12, %c0_13] : memref<128x128xbf16, #tpu.memory_space<vmem>>, vector<128x128xbf16>
    %cst_14 = arith.constant dense<0.000000e+00> : vector<8x128xf32>
    %18 = tpu.matmul %16, %17, %cst_14 {dimension_numbers = #tpu.dot_dimension_numbers<[1], [0], [0], [1], [0, 0, 1, 1], [], []>} : vector<8x128xbf16>, vector<128x128xbf16>, vector<8x128xf32> -> vector<8x128xf32>
    %c0_15 = arith.constant 0 : index
    %c0_16 = arith.constant 0 : index
    %19 = vector.load %arg7[%c0_15, %c0_16] : memref<1x128xf32, #tpu.memory_space<vmem>>, vector<1x128xf32>
    %20 = vector.broadcast %19 : vector<1x128xf32> to vector<8x128xf32>
    %21 = arith.addf %18, %20 : vector<8x128xf32>
    %c0_17 = arith.constant 0 : index
    %c0_18 = arith.constant 0 : index
    %22 = vector.load %arg8[%c0_17, %c0_18] : memref<8x128xf32, #tpu.memory_space<vmem>>, vector<8x128xf32>
    tpu.vector_store %arg8[%c0_17, %c0_18], %21 {strides = array<i32>} : memref<8x128xf32, #tpu.memory_space<vmem>>, vector<8x128xf32>,
    return
  }
  func.func @transform_0(%arg0: i32) -> (i32, i32) {
    %c0_i32 = arith.constant 0 : i32
    %c0_i32_0 = arith.constant 0 : i32
    return %arg0, %c0_i32 : i32, i32
  }
  func.func @transform_1(%arg0: i32) -> (i32, i32) {
    %c0_i32 = arith.constant 0 : i32
    %c0_i32_0 = arith.constant 0 : i32
    %c0_i32_1 = arith.constant 0 : i32
    return %c0_i32, %c0_i32_0 : i32, i32
  }
  func.func @transform_2(%arg0: i32) -> (i32, i32) {
    %c0_i32 = arith.constant 0 : i32
    %c0_i32_0 = arith.constant 0 : i32
    %c0_i32_1 = arith.constant 0 : i32
    return %c0_i32, %c0_i32_0 : i32, i32
  }
  func.func @transform_3(%arg0: i32) -> (i32, i32) {
    %c0_i32 = arith.constant 0 : i32
    %c0_i32_0 = arith.constant 0 : i32
    %c0_i32_1 = arith.constant 0 : i32
    return %c0_i32, %c0_i32_0 : i32, i32
  }
  func.func @transform_4(%arg0: i32) -> (i32, i32) {
    %c0_i32 = arith.constant 0 : i32
    %c0_i32_0 = arith.constant 0 : i32
    %c0_i32_1 = arith.constant 0 : i32
    return %c0_i32, %c0_i32_0 : i32, i32
  }
  func.func @transform_5(%arg0: i32) -> (i32, i32) {
    %c0_i32 = arith.constant 0 : i32
    %c0_i32_0 = arith.constant 0 : i32
    %c0_i32_1 = arith.constant 0 : i32
    return %c0_i32, %c0_i32_0 : i32, i32
  }
  func.func @transform_6(%arg0: i32) -> (i32, i32) {
    %c0_i32 = arith.constant 0 : i32
    %c0_i32_0 = arith.constant 0 : i32
    %c0_i32_1 = arith.constant 0 : i32
    return %c0_i32, %c0_i32_0 : i32, i32
  }
  func.func @transform_7(%arg0: i32) -> (i32, i32) {
    %c0_i32 = arith.constant 0 : i32
    %c0_i32_0 = arith.constant 0 : i32
    return %arg0, %c0_i32 : i32, i32
  }
}

</mosaic_0001>

<llo_original>
// kernel: trashnet_forward.5
$region0: #{trashnet_forward.5}
  #allocation0 [shape = 'u32[]', space=smem, size = 0x4, offset = 0x4, fixed_abs, tag = 'smem constant byte address 0x4 - core index']
  #allocation1 [shape = 'u32[144,128]{1,0:T(1,128)}', space=vmem, size = 0x12000, scoped, tag = 'internal scratch']
  %s0 = inlined_call_operand.vmem [shape: bf16[2048,75], index: 0, kind: input, shape index: {}]
  %s1 = inlined_call_operand.vmem [shape: bf16[75,128], index: 1, kind: input, shape index: {}]
  %s2 = inlined_call_operand.vmem [shape: f32[1,128], index: 2, kind: input, shape index: {}]
  %s3 = inlined_call_operand.vmem [shape: bf16[2048,128], index: 3, kind: output, shape index: {}]
  %s4 = sld [smem:[#allocation0]]
  $region45: #{trashnet_forward.5} parent=0
    _
  %s6 = ssub.s32 1, %s4
  %s7 = scalar_select 0, %s6, %s4
  loop: start=0, step=1, limit=6
  $region2: #{trashnet_forward.5} parent=0 // loop_pre_header
    _
  $region3: #{trashnet_forward.5} parent=0 // loop_header
    %s9 = sphi 0, %s13
    %p10 = scmp.ge.s32.totalorder %s9, 6
    %s19 = sphi 0, %s21
    %s22 = sphi 0, %s19
    %s23 = sphi 0, %s22
    %s39 = sphi 0, %s23
    %s43 = sphi 0, %s43
    %s45 = sphi 0, %s43
    %s46 = sphi 0, %s45
    %s60 = sphi 0, %s46
    %s64 = sphi 0, %s64
    %s66 = sphi 0, %s64
    %s67 = sphi 0, %s66
    %s81 = sphi 0, %s67
    %s87 = sphi 0, %s89
    %s90 = sphi 0, %s87
    %s91 = sphi 0, %s90
    %s107 = sphi 0, %s91
  $region4: #{trashnet_forward.5} parent=0 // loop_header_branch
    %12 = sbr.rel (%p10) target = $region8
  $region5: #{trashnet_forward.5} parent=0 // loop_body
    %s14 = ssub.s32 %s9, 1
    %s15 = ssub.s32 %s9, 2
    %s16 = sadd.s32 %s9, 1
    %s17 = ssub.s32 %s9, %s16
    %p18 = scmp.eq.s32.totalorder %s17, 0
    %s20 = sadd.s32 %s19, 1
    %s21 = scalar_select %p18, %s19, %s20
    %p24 = pneg %p18
    %p25 = scmp.eq.s32.totalorder %s9, 3
    %p26 = por %p24, %p25
    %p27 = scmp.ne.s32.totalorder %s19, %s22
    %p28 = scmp.eq.s32.totalorder %s9, 0
    %p29 = por %p27, %p28
    %p30 = scmp.ne.s32.totalorder %s19, %s22
    %p31 = scmp.eq.s32.totalorder %s14, 3
    %p32 = por %p30, %p31
    %p33 = scmp.ne.s32.totalorder %s22, %s23
    %p34 = scmp.eq.s32.totalorder %s14, 0
    %p35 = por %p33, %p34
    %p36 = scmp.ne.s32.totalorder %s22, %s23
    %p37 = scmp.eq.s32.totalorder %s15, 3
    %p38 = por %p36, %p37
    %p40 = scmp.ne.s32.totalorder %s23, %s39
    %p41 = scmp.eq.s32.totalorder %s15, 0
    %p42 = por %p40, %p41
    %s44 = sadd.s32 %s43, 1
    %p47 = scmp.eq.s32.totalorder %s9, 3
    %p48 = scmp.ne.s32.totalorder %s43, %s45
    %p49 = scmp.eq.s32.totalorder %s9, 0
    %p50 = por %p48, %p49
    %p51 = scmp.ne.s32.totalorder %s43, %s45
    %p52 = scmp.eq.s32.totalorder %s14, 3
    %p53 = por %p51, %p52
    %p54 = scmp.ne.s32.totalorder %s45, %s46
    %p55 = scmp.eq.s32.totalorder %s14, 0
    %p56 = por %p54, %p55
    %p57 = scmp.ne.s32.totalorder %s45, %s46
    %p58 = scmp.eq.s32.totalorder %s15, 3
    %p59 = por %p57, %p58
    %p61 = scmp.ne.s32.totalorder %s46, %s60
    %p62 = scmp.eq.s32.totalorder %s15, 0
    %p63 = por %p61, %p62
    %s65 = sadd.s32 %s64, 1
    %p68 = scmp.eq.s32.totalorder %s9, 3
    %p69 = scmp.ne.s32.totalorder %s64, %s66
    %p70 = scmp.eq.s32.totalorder %s9, 0
    %p71 = por %p69, %p70
    %p72 = scmp.ne.s32.totalorder %s64, %s66
    %p73 = scmp.eq.s32.totalorder %s14, 3
    %p74 = por %p72, %p73
    %p75 = scmp.ne.s32.totalorder %s66, %s67
    %p76 = scmp.eq.s32.totalorder %s14, 0
    %p77 = por %p75, %p76
    %p78 = scmp.ne.s32.totalorder %s66, %s67
    %p79 = scmp.eq.s32.totalorder %s15, 3
    %p80 = por %p78, %p79
    %p82 = scmp.ne.s32.totalorder %s67, %s81
    %p83 = scmp.eq.s32.totalorder %s15, 0
    %p84 = por %p82, %p83
    %s85 = ssub.s32 %s9, %s16
    %p86 = scmp.eq.s32.totalorder %s85, 0
    %s88 = sadd.s32 %s87, 1
    %s89 = scalar_select %p86, %s87, %s88
    %p92 = pneg %p86
    %p93 = scmp.eq.s32.totalorder %s9, 3
    %p94 = por %p92, %p93
    %p95 = scmp.ne.s32.totalorder %s87, %s90
    %p96 = scmp.eq.s32.totalorder %s9, 0
    %p97 = por %p95, %p96
    %p98 = scmp.ne.s32.totalorder %s87, %s90
    %p99 = scmp.eq.s32.totalorder %s14, 3
    %p100 = por %p98, %p99
    %p101 = scmp.ne.s32.totalorder %s90, %s91
    %p102 = scmp.eq.s32.totalorder %s14, 0
    %p103 = por %p101, %p102
    %p104 = scmp.ne.s32.totalorder %s90, %s91
    %p105 = scmp.eq.s32.totalorder %s15, 3
    %p106 = por %p104, %p105
    %p108 = scmp.ne.s32.totalorder %s91, %s107
    %p109 = scmp.eq.s32.totalorder %s15, 0
    %p110 = por %p108, %p109
    %p111 = scmp.le.s32.totalorder 1, %s9
    %p112 = scmp.lt.s32.totalorder %s9, 5
    %p113 = pnand %p111, %p112
    %p114 = pneg %p113
    // Predicated region
    $region9: #{trashnet_forward.5} parent=5 // pred_check
      _
    $region10: #{trashnet_forward.5} parent=5 // pred_check_branch
      %116 = sbr.rel (%p113) target = $region12
    $region11: #{trashnet_forward.5} parent=5 // pred_region
      %s117 = ssub.s32 %s9, 1
      // Predicated region
      $region13: #{trashnet_forward.5} parent=11 // pred_check
        %p118 = pneg %p56
      $region14: #{trashnet_forward.5} parent=11 // pred_check_branch
        %120 = sbr.rel (%p118) target = $region16
      $region15: #{trashnet_forward.5} parent=11 // pred_region
        _
      $region16: #{trashnet_forward.5} parent=11 // pred_fallthru
        _
      // Predicated region
      $region17: #{trashnet_forward.5} parent=11 // pred_check
        %p121 = pneg %p77
      $region18: #{trashnet_forward.5} parent=11 // pred_check_branch
        %123 = sbr.rel (%p121) target = $region20
      $region19: #{trashnet_forward.5} parent=11 // pred_region
        _
      $region20: #{trashnet_forward.5} parent=11 // pred_fallthru
        _
    $region12: #{trashnet_forward.5} parent=5 // pred_fallthru
      _
    %p124 = scmp.lt.s32.totalorder %s9, 4
    // Predicated region
    $region21: #{trashnet_forward.5} parent=5 // pred_check
      %p125 = pneg %p124
    $region22: #{trashnet_forward.5} parent=5 // pred_check_branch
      %127 = sbr.rel (%p125) target = $region24
    $region23: #{trashnet_forward.5} parent=5 // pred_region
      // Predicated region
      $region25: #{trashnet_forward.5} parent=23 // pred_check
        %p128 = pneg %p29
      $region26: #{trashnet_forward.5} parent=23 // pred_check_branch
        %130 = sbr.rel (%p128) target = $region28
      $region27: #{trashnet_forward.5} parent=23 // pred_region
        %s131 = smul.u32 64, %s9
        %p132 = scmp.lt.s32.totalorder %s131, 255
        %s133 = scalar_select %p132, %s131, 255
        %s134 = smul.addr %s133, 4
        %s135 = scalar_lea.vmem %s0, %s134
        %s136 = smul.u32 64, %s9
      $region28: #{trashnet_forward.5} parent=23 // pred_fallthru
        _
    $region24: #{trashnet_forward.5} parent=5 // pred_fallthru
      _
    %p137 = scmp.le.s32.totalorder 1, %s9
    %p138 = scmp.lt.s32.totalorder %s9, 5
    %p139 = pnand %p137, %p138
    %p140 = pneg %p139
    // Predicated region
    $region29: #{trashnet_forward.5} parent=5 // pred_check
      _
    $region30: #{trashnet_forward.5} parent=5 // pred_check_branch
      %142 = sbr.rel (%p139) target = $region32
    $region31: #{trashnet_forward.5} parent=5 // pred_region
      %s143 = ssub.s32 %s9, 1
      %s144 = smul.u32 64, %s14
      %p145 = scmp.lt.s32.totalorder %s144, 255
      %s146 = scalar_select %p145, %s144, 255
      %s147 = smul.addr %s146, 4
      %s148 = scalar_lea.vmem %s0, %s147
      %p149 = pneg %p35
      %p150 = pneg %p32
      %p151 = pneg %p56
      %p152 = pneg %p53
      %p153 = pneg %p77
      %p154 = pneg %p74
      %p155 = pneg %p103
      %p156 = pneg %p100
      %s157 = smul.u32 64, %s14
      %p158 = scmp.lt.s32.totalorder %s157, 255
      %s159 = scalar_select %p158, %s157, 255
      %s160 = smul.addr %s159, 4
      %s161 = scalar_lea.vmem %s3, %s160
      %s162 = smul.u32 64, %s14
      %p163 = scmp.lt.s32.totalorder %s162, 255
      %s164 = scalar_select %p163, %s162, 255
      %s165 = smul.addr %s164, 4
      %s166 = scalar_lea.vmem %s0, %s165
      %s167 = smul.u32 64, %s14
      %s168 = smul.u32 64, %s14
      %p169 = scmp.lt.s32.totalorder %s168, 255
      %s170 = scalar_select %p169, %s168, 255
      %s171 = smul.addr %s170, 4
      %s172 = scalar_lea.vmem %s3, %s171
      %s173 = smul.u32 64, %s14
      %v175 = vld [vmem:[%s166] sm:$0xf]
      %v176 = vld [vmem:[%s166 + $0x4] sm:$0xf]
      %v177 = vld [vmem:[%s166 + $0x8] sm:$0xf]
      %v178 = vld [vmem:[%s166 + $0xc] sm:$0xf]
      %v179 = vld [vmem:[%s166 + $0x10] sm:$0xf]
      %v180 = vld [vmem:[%s166 + $0x14] sm:$0xf]
      %v181 = vld [vmem:[%s166 + $0x18] sm:$0xf]
      %v182 = vld [vmem:[%s166 + $0x1c] sm:$0xf]
      %v183 = vld [vmem:[%s166 + $0x20] sm:$0xf]
      %v184 = vld [vmem:[%s166 + $0x24] sm:$0xf]
      %v185 = vld [vmem:[%s166 + $0x28] sm:$0xf]
      %v186 = vld [vmem:[%s166 + $0x2c] sm:$0xf]
      %v187 = vld [vmem:[%s166 + $0x30] sm:$0xf]
      %v188 = vld [vmem:[%s166 + $0x34] sm:$0xf]
      %v189 = vld [vmem:[%s166 + $0x38] sm:$0xf]
      %v190 = vld [vmem:[%s166 + $0x3c] sm:$0xf]
      %v191 = vld [vmem:[%s166 + $0x40] sm:$0xf]
      %v192 = vld [vmem:[%s166 + $0x44] sm:$0xf]
      %v193 = vld [vmem:[%s166 + $0x48] sm:$0xf]
      %v194 = vld [vmem:[%s166 + $0x4c] sm:$0xf]
      %v195 = vld [vmem:[%s166 + $0x50] sm:$0xf]
      %v196 = vld [vmem:[%s166 + $0x54] sm:$0xf]
      %v197 = vld [vmem:[%s166 + $0x58] sm:$0xf]
      %v198 = vld [vmem:[%s166 + $0x5c] sm:$0xf]
      %v199 = vld [vmem:[%s166 + $0x60] sm:$0xf]
      %v200 = vld [vmem:[%s166 + $0x64] sm:$0xf]
      %v201 = vld [vmem:[%s166 + $0x68] sm:$0xf]
      %v202 = vld [vmem:[%s166 + $0x6c] sm:$0xf]
      %v203 = vld [vmem:[%s166 + $0x70] sm:$0xf]
      %v204 = vld [vmem:[%s166 + $0x74] sm:$0xf]
      %v205 = vld [vmem:[%s166 + $0x78] sm:$0xf]
      %v206 = vld [vmem:[%s166 + $0x7c] sm:$0xf]
      %v207 = vld [vmem:[%s166 + $0x80] sm:$0xf]
      %v208 = vld [vmem:[%s166 + $0x84] sm:$0xf]
      %v209 = vld [vmem:[%s166 + $0x88] sm:$0xf]
      %v210 = vld [vmem:[%s166 + $0x8c] sm:$0xf]
      %v211 = vld [vmem:[%s166 + $0x90] sm:$0xf]
      %v212 = vld [vmem:[%s166 + $0x94] sm:$0xf]
      %v213 = vld [vmem:[%s166 + $0x98] sm:$0xf]
      %v214 = vld [vmem:[%s166 + $0x9c] sm:$0xf]
      %v215 = vld [vmem:[%s166 + $0xa0] sm:$0xf]
      %v216 = vld [vmem:[%s166 + $0xa4] sm:$0xf]
      %v217 = vld [vmem:[%s166 + $0xa8] sm:$0xf]
      %v218 = vld [vmem:[%s166 + $0xac] sm:$0xf]
      %v219 = vld [vmem:[%s166 + $0xb0] sm:$0xf]
      %v220 = vld [vmem:[%s166 + $0xb4] sm:$0xf]
      %v221 = vld [vmem:[%s166 + $0xb8] sm:$0xf]
      %v222 = vld [vmem:[%s166 + $0xbc] sm:$0xf]
      %v223 = vld [vmem:[%s166 + $0xc0] sm:$0xf]
      %v224 = vld [vmem:[%s166 + $0xc4] sm:$0xf]
      %v225 = vld [vmem:[%s166 + $0xc8] sm:$0xf]
      %v226 = vld [vmem:[%s166 + $0xcc] sm:$0xf]
      %v227 = vld [vmem:[%s166 + $0xd0] sm:$0xf]
      %v228 = vld [vmem:[%s166 + $0xd4] sm:$0xf]
      %v229 = vld [vmem:[%s166 + $0xd8] sm:$0xf]
      %v230 = vld [vmem:[%s166 + $0xdc] sm:$0xf]
      %v231 = vld [vmem:[%s166 + $0xe0] sm:$0xf]
      %v232 = vld [vmem:[%s166 + $0xe4] sm:$0xf]
      %v233 = vld [vmem:[%s166 + $0xe8] sm:$0xf]
      %v234 = vld [vmem:[%s166 + $0xec] sm:$0xf]
      %v235 = vld [vmem:[%s166 + $0xf0] sm:$0xf]
      %v236 = vld [vmem:[%s166 + $0xf4] sm:$0xf]
      %v237 = vld [vmem:[%s166 + $0xf8] sm:$0xf]
      %v238 = vld [vmem:[%s166 + $0xfc] sm:$0xf]
      %v239 = vld [vmem:[%s1] sm:$0xf]
      %v240 = vld [vmem:[%s1 + $0x4] sm:$0xf]
      %v241 = vld [vmem:[%s1 + $0x8] sm:$0xf]
      %v242 = vld [vmem:[%s1 + $0xc] sm:$0xf]
      %v243 = vld [vmem:[%s1 + $0x10] sm:$0xf]
      %v244 = vld [vmem:[%s1 + $0x14] sm:$0xf]
      %v245 = vld [vmem:[%s1 + $0x18] sm:$0xf]
      %v246 = vld [vmem:[%s1 + $0x1c] sm:$0xf]
      %v247 = vld [vmem:[%s1 + $0x20] sm:$0xf]
      %v248 = vld [vmem:[%s1 + $0x24] sm:$0x3]
      %v249 = vld [vmem:[%s2] sm:$0x1]
      %v251 = vlaneseq
      %v252 = vshrl.u32 %v251, 7
      %v253 = vsub.s32 0, %v252
      %v254 = vrot.slane %v249, %v253
      %v320 = vunpack.c.l.b16 %v175
      %v321 = vunpack.c.l.b16 %v176
      %v322 = vunpack.c.l.b16 %v177
      %v323 = vunpack.c.l.b16 %v178
      %v324 = vunpack.c.l.b16 %v179
      %v325 = vunpack.c.l.b16 %v180
      %v326 = vunpack.c.l.b16 %v181
      %v327 = vunpack.c.l.b16 %v182
      %v328 = vunpack.c.l.b16 %v183
      %v329 = vunpack.c.l.b16 %v184
      %v330 = vunpack.c.l.b16 %v185
      %v331 = vunpack.c.l.b16 %v186
      %v332 = vunpack.c.l.b16 %v187
      %v333 = vunpack.c.l.b16 %v188
      %v334 = vunpack.c.l.b16 %v189
      %v335 = vunpack.c.l.b16 %v190
      %v336 = vunpack.c.l.b16 %v191
      %v337 = vunpack.c.l.b16 %v192
      %v338 = vunpack.c.l.b16 %v193
      %v339 = vunpack.c.l.b16 %v194
      %v340 = vunpack.c.l.b16 %v195
      %v341 = vunpack.c.l.b16 %v196
      %v342 = vunpack.c.l.b16 %v197
      %v343 = vunpack.c.l.b16 %v198
      %v344 = vunpack.c.l.b16 %v199
      %v345 = vunpack.c.l.b16 %v200
      %v346 = vunpack.c.l.b16 %v201
      %v347 = vunpack.c.l.b16 %v202
      %v348 = vunpack.c.l.b16 %v203
      %v349 = vunpack.c.l.b16 %v204
      %v350 = vunpack.c.l.b16 %v205
      %v351 = vunpack.c.l.b16 %v206
      %v352 = vunpack.c.l.b16 %v207
      %v353 = vunpack.c.l.b16 %v208
      %v354 = vunpack.c.l.b16 %v209
      %v355 = vunpack.c.l.b16 %v210
      %v356 = vunpack.c.l.b16 %v211
      %v357 = vunpack.c.l.b16 %v212
      %v358 = vunpack.c.l.b16 %v213
      %v359 = vunpack.c.l.b16 %v214
      %v360 = vunpack.c.l.b16 %v215
      %v361 = vunpack.c.l.b16 %v216
      %v362 = vunpack.c.l.b16 %v217
      %v363 = vunpack.c.l.b16 %v218
      %v364 = vunpack.c.l.b16 %v219
      %v365 = vunpack.c.l.b16 %v220
      %v366 = vunpack.c.l.b16 %v221
      %v367 = vunpack.c.l.b16 %v222
      %v368 = vunpack.c.l.b16 %v223
      %v369 = vunpack.c.l.b16 %v224
      %v370 = vunpack.c.l.b16 %v225
      %v371 = vunpack.c.l.b16 %v226
      %v372 = vunpack.c.l.b16 %v227
      %v373 = vunpack.c.l.b16 %v228
      %v374 = vunpack.c.l.b16 %v229
      %v375 = vunpack.c.l.b16 %v230
      %v376 = vunpack.c.l.b16 %v231
      %v377 = vunpack.c.l.b16 %v232
      %v378 = vunpack.c.l.b16 %v233
      %v379 = vunpack.c.l.b16 %v234
      %v380 = vunpack.c.l.b16 %v235
      %v381 = vunpack.c.l.b16 %v236
      %v382 = vunpack.c.l.b16 %v237
      %v383 = vunpack.c.l.b16 %v238
      %v384 = vpack.c.b16 %v321, %v320
      %v385 = vpack.c.b16 %v323, %v322
      %v386 = vpack.c.b16 %v325, %v324
      %v387 = vpack.c.b16 %v327, %v326
      %v388 = vpack.c.b16 %v329, %v328
      %v389 = vpack.c.b16 %v331, %v330
      %v390 = vpack.c.b16 %v333, %v332
      %v391 = vpack.c.b16 %v335, %v334
      %v392 = vpack.c.b16 %v337, %v336
      %v393 = vpack.c.b16 %v339, %v338
      %v394 = vpack.c.b16 %v341, %v340
      %v395 = vpack.c.b16 %v343, %v342
      %v396 = vpack.c.b16 %v345, %v344
      %v397 = vpack.c.b16 %v347, %v346
      %v398 = vpack.c.b16 %v349, %v348
      %v399 = vpack.c.b16 %v351, %v350
      %v400 = vpack.c.b16 %v353, %v352
      %v401 = vpack.c.b16 %v355, %v354
      %v402 = vpack.c.b16 %v357, %v356
      %v403 = vpack.c.b16 %v359, %v358
      %v404 = vpack.c.b16 %v361, %v360
      %v405 = vpack.c.b16 %v363, %v362
      %v406 = vpack.c.b16 %v365, %v364
      %v407 = vpack.c.b16 %v367, %v366
      %v408 = vpack.c.b16 %v369, %v368
      %v409 = vpack.c.b16 %v371, %v370
      %v410 = vpack.c.b16 %v373, %v372
      %v411 = vpack.c.b16 %v375, %v374
      %v412 = vpack.c.b16 %v377, %v376
      %v413 = vpack.c.b16 %v379, %v378
      %v414 = vpack.c.b16 %v381, %v380
      %v415 = vpack.c.b16 %v383, %v382
      %v426 = vunpack.c.l.b16 %v239
      %v427 = vunpack.c.l.b16 %v240
      %v428 = vunpack.c.l.b16 %v241
      %v429 = vunpack.c.l.b16 %v242
      %v430 = vunpack.c.l.b16 %v243
      %v431 = vunpack.c.l.b16 %v244
      %v432 = vunpack.c.l.b16 %v245
      %v433 = vunpack.c.l.b16 %v246
      %v434 = vunpack.c.l.b16 %v247
      %v435 = vunpack.c.l.b16 %v248
      %v436 = vpack.c.b16 %v427, %v426
      %v437 = vpack.c.b16 %v429, %v428
      %v438 = vpack.c.b16 %v431, %v430
      %v439 = vpack.c.b16 %v433, %v432
      %v440 = vpack.c.b16 %v435, %v434
      %vm445 = vcmask 613376
      %v447 = vsel %vm445, %v384, 0
      %v450 = vsel %vm445, %v385, 0
      %v453 = vsel %vm445, %v386, 0
      %v456 = vsel %vm445, %v387, 0
      %v459 = vsel %vm445, %v388, 0
      %v462 = vsel %vm445, %v389, 0
      %v465 = vsel %vm445, %v390, 0
      %v468 = vsel %vm445, %v391, 0
      %v471 = vsel %vm445, %v392, 0
      %v474 = vsel %vm445, %v393, 0
      %v477 = vsel %vm445, %v394, 0
      %v480 = vsel %vm445, %v395, 0
      %v483 = vsel %vm445, %v396, 0
      %v486 = vsel %vm445, %v397, 0
      %v489 = vsel %vm445, %v398, 0
      %v492 = vsel %vm445, %v399, 0
      %v495 = vsel %vm445, %v400, 0
      %v498 = vsel %vm445, %v401, 0
      %v501 = vsel %vm445, %v402, 0
      %v504 = vsel %vm445, %v403, 0
      %v507 = vsel %vm445, %v404, 0
      %v510 = vsel %vm445, %v405, 0
      %v513 = vsel %vm445, %v406, 0
      %v516 = vsel %vm445, %v407, 0
      %v519 = vsel %vm445, %v408, 0
      %v522 = vsel %vm445, %v409, 0
      %v525 = vsel %vm445, %v410, 0
      %v528 = vsel %vm445, %v411, 0
      %v531 = vsel %vm445, %v412, 0
      %v534 = vsel %vm445, %v413, 0
      %v537 = vsel %vm445, %v414, 0
      %v540 = vsel %vm445, %v415, 0
      %vm542 = vcmask 1044480
      %vm543 = vcmask 1045504
      %v544 = vsel %vm542, 4294967295, 65535
      %v545 = vsel %vm543, %v544, 0
      %v547 = vand.u32 %v440, %v545
      %549 = vmatprep.subr.bf16.mxu0 0
      %550 = vmatpush1.bf16.msra.mxu0 %v436
      %551 = vmatprep.subr.bf16.mxu0 0
      %552 = vmatpush1.bf16.msra.mxu0 %v437
      %553 = vmatprep.subr.bf16.mxu0 0
      %554 = vmatpush1.bf16.msra.mxu0 %v438
      %555 = vmatprep.subr.bf16.mxu0 0
      %556 = vmatpush1.bf16.msra.mxu0 %v439
      %557 = vmatprep.subr.bf16.mxu0 0
      %558 = vmatpush1.bf16.msra.mxu0 %v547
      %559 = vmatprep.subr.bf16.mxu0 0
      %560 = vmatpush1.bf16.msra.mxu0 0
      %561 = vmatprep.subr.bf16.mxu0 0
      %562 = vmatpush1.bf16.msra.mxu0 0
      %563 = vmatprep.subr.bf16.mxu0 0
      %564 = vmatpush1.bf16.msra.mxu0 0
      %565 = vmatprep.subr.bf16.mxu0 0
      %566 = vmatpush1.bf16.msra.mxu0 0
      %567 = vmatprep.subr.bf16.mxu0 0
      %568 = vmatpush1.bf16.msra.mxu0 0
      %569 = vmatprep.subr.bf16.mxu0 0
      %570 = vmatpush1.bf16.msra.mxu0 0
      %571 = vmatprep.subr.bf16.mxu0 0
      %572 = vmatpush1.bf16.msra.mxu0 0
      %573 = vmatprep.subr.bf16.mxu0 0
      %574 = vmatpush1.bf16.msra.mxu0 0
      %575 = vmatprep.subr.bf16.mxu0 0
      %576 = vmatpush1.bf16.msra.mxu0 0
      %577 = vmatprep.subr.bf16.mxu0 0
      %578 = vmatpush1.bf16.msra.mxu0 0
      %579 = vmatprep.subr.bf16.mxu0 0
      %580 = vmatpush1.bf16.msra.mxu0 0
      %581 = vmatprep.mubr.bf16.mxu0 0
      %582 = vmatmul.mubr.bf16.gmra.mrb[0].mxu0 %v447
      %v583 = vpop.f32.mrb[0].mxu0
      %v584 = vadd.f32 %v254, %v583
      %v585 = vpop.f32.mrb[0].mxu0
      %v586 = vpop.f32.mrb[0].mxu0
      %v587 = vadd.f32 %v254, %v586
      %v588 = vpop.f32.mrb[0].mxu0
      %589 = vmatprep.mubr.bf16.mxu0 0
      %590 = vmatmul.mubr.bf16.gmra.mrb[0].mxu0 %v450
      %v591 = vpop.f32.mrb[0].mxu0
      %v592 = vadd.f32 %v254, %v591
      %v593 = vpop.f32.mrb[0].mxu0
      %v594 = vpop.f32.mrb[0].mxu0
      %v595 = vadd.f32 %v254, %v594
      %v596 = vpop.f32.mrb[0].mxu0
      %597 = vmatprep.mubr.bf16.mxu0 0
      %598 = vmatmul.mubr.bf16.gmra.mrb[0].mxu0 %v453
      %v599 = vpop.f32.mrb[0].mxu0
      %v600 = vadd.f32 %v254, %v599
      %v601 = vpop.f32.mrb[0].mxu0
      %v602 = vpop.f32.mrb[0].mxu0
      %v603 = vadd.f32 %v254, %v602
      %v604 = vpop.f32.mrb[0].mxu0
      %605 = vmatprep.mubr.bf16.mxu0 0
      %606 = vmatmul.mubr.bf16.gmra.mrb[0].mxu0 %v456
      %v607 = vpop.f32.mrb[0].mxu0
      %v608 = vadd.f32 %v254, %v607
      %v609 = vpop.f32.mrb[0].mxu0
      %v610 = vpop.f32.mrb[0].mxu0
      %v611 = vadd.f32 %v254, %v610
      %v612 = vpop.f32.mrb[0].mxu0
      %613 = vmatprep.mubr.bf16.mxu0 0
      %614 = vmatmul.mubr.bf16.gmra.mrb[0].mxu0 %v459
      %v615 = vpop.f32.mrb[0].mxu0
      %v616 = vadd.f32 %v254, %v615
      %v617 = vpop.f32.mrb[0].mxu0
      %v618 = vpop.f32.mrb[0].mxu0
      %v619 = vadd.f32 %v254, %v618
      %v620 = vpop.f32.mrb[0].mxu0
      %621 = vmatprep.mubr.bf16.mxu0 0
      %622 = vmatmul.mubr.bf16.gmra.mrb[0].mxu0 %v462
      %v623 = vpop.f32.mrb[0].mxu0
      %v624 = vadd.f32 %v254, %v623
      %v625 = vpop.f32.mrb[0].mxu0
      %v626 = vpop.f32.mrb[0].mxu0
      %v627 = vadd.f32 %v254, %v626
      %v628 = vpop.f32.mrb[0].mxu0
      %629 = vmatprep.mubr.bf16.mxu0 0
      %630 = vmatmul.mubr.bf16.gmra.mrb[0].mxu0 %v465
      %v631 = vpop.f32.mrb[0].mxu0
      %v632 = vadd.f32 %v254, %v631
      %v633 = vpop.f32.mrb[0].mxu0
      %v634 = vpop.f32.mrb[0].mxu0
      %v635 = vadd.f32 %v254, %v634
      %v636 = vpop.f32.mrb[0].mxu0
      %637 = vmatprep.mubr.bf16.mxu0 0
      %638 = vmatmul.mubr.bf16.gmra.mrb[0].mxu0 %v468
      %v639 = vpop.f32.mrb[0].mxu0
      %v640 = vadd.f32 %v254, %v639
      %v641 = vpop.f32.mrb[0].mxu0
      %v642 = vpop.f32.mrb[0].mxu0
      %v643 = vadd.f32 %v254, %v642
      %v644 = vpop.f32.mrb[0].mxu0
      %645 = vmatprep.mubr.bf16.mxu0 0
      %646 = vmatmul.mubr.bf16.gmra.mrb[0].mxu0 %v471
      %v647 = vpop.f32.mrb[0].mxu0
      %v648 = vadd.f32 %v254, %v647
      %v649 = vpop.f32.mrb[0].mxu0
      %v650 = vpop.f32.mrb[0].mxu0
      %v651 = vadd.f32 %v254, %v650
      %v652 = vpop.f32.mrb[0].mxu0
      %653 = vmatprep.mubr.bf16.mxu0 0
      %654 = vmatmul.mubr.bf16.gmra.mrb[0].mxu0 %v474
      %v655 = vpop.f32.mrb[0].mxu0
      %v656 = vadd.f32 %v254, %v655
      %v657 = vpop.f32.mrb[0].mxu0
      %v658 = vpop.f32.mrb[0].mxu0
      %v659 = vadd.f32 %v254, %v658
      %v660 = vpop.f32.mrb[0].mxu0
      %661 = vmatprep.mubr.bf16.mxu0 0
      %662 = vmatmul.mubr.bf16.gmra.mrb[0].mxu0 %v477
      %v663 = vpop.f32.mrb[0].mxu0
      %v664 = vadd.f32 %v254, %v663
      %v665 = vpop.f32.mrb[0].mxu0
      %v666 = vpop.f32.mrb[0].mxu0
      %v667 = vadd.f32 %v254, %v666
      %v668 = vpop.f32.mrb[0].mxu0
      %669 = vmatprep.mubr.bf16.mxu0 0
      %670 = vmatmul.mubr.bf16.gmra.mrb[0].mxu0 %v480
      %v671 = vpop.f32.mrb[0].mxu0
      %v672 = vadd.f32 %v254, %v671
      %v673 = vpop.f32.mrb[0].mxu0
      %v674 = vpop.f32.mrb[0].mxu0
      %v675 = vadd.f32 %v254, %v674
      %v676 = vpop.f32.mrb[0].mxu0
      %677 = vmatprep.mubr.bf16.mxu0 0
      %678 = vmatmul.mubr.bf16.gmra.mrb[0].mxu0 %v483
      %v679 = vpop.f32.mrb[0].mxu0
      %v680 = vadd.f32 %v254, %v679
      %v681 = vpop.f32.mrb[0].mxu0
      %v682 = vpop.f32.mrb[0].mxu0
      %v683 = vadd.f32 %v254, %v682
      %v684 = vpop.f32.mrb[0].mxu0
      %685 = vmatprep.mubr.bf16.mxu0 0
      %686 = vmatmul.mubr.bf16.gmra.mrb[0].mxu0 %v486
      %v687 = vpop.f32.mrb[0].mxu0
      %v688 = vadd.f32 %v254, %v687
      %v689 = vpop.f32.mrb[0].mxu0
      %v690 = vpop.f32.mrb[0].mxu0
      %v691 = vadd.f32 %v254, %v690
      %v692 = vpop.f32.mrb[0].mxu0
      %693 = vmatprep.mubr.bf16.mxu0 0
      %694 = vmatmul.mubr.bf16.gmra.mrb[0].mxu0 %v489
      %v695 = vpop.f32.mrb[0].mxu0
      %v696 = vadd.f32 %v254, %v695
      %v697 = vpop.f32.mrb[0].mxu0
      %v698 = vpop.f32.mrb[0].mxu0
      %v699 = vadd.f32 %v254, %v698
      %v700 = vpop.f32.mrb[0].mxu0
      %701 = vmatprep.mubr.bf16.mxu0 0
      %702 = vmatmul.mubr.bf16.gmra.mrb[0].mxu0 %v492
      %v703 = vpop.f32.mrb[0].mxu0
      %v704 = vadd.f32 %v254, %v703
      %v705 = vpop.f32.mrb[0].mxu0
      %v706 = vpop.f32.mrb[0].mxu0
      %v707 = vadd.f32 %v254, %v706
      %v708 = vpop.f32.mrb[0].mxu0
      %709 = vmatprep.mubr.bf16.mxu0 0
      %710 = vmatmul.mubr.bf16.gmra.mrb[0].mxu0 %v495
      %v711 = vpop.f32.mrb[0].mxu0
      %v712 = vadd.f32 %v254, %v711
      %v713 = vpop.f32.mrb[0].mxu0
      %v714 = vpop.f32.mrb[0].mxu0
      %v715 = vadd.f32 %v254, %v714
      %v716 = vpop.f32.mrb[0].mxu0
      %717 = vmatprep.mubr.bf16.mxu0 0
      %718 = vmatmul.mubr.bf16.gmra.mrb[0].mxu0 %v498
      %v719 = vpop.f32.mrb[0].mxu0
      %v720 = vadd.f32 %v254, %v719
      %v721 = vpop.f32.mrb[0].mxu0
      %v722 = vpop.f32.mrb[0].mxu0
      %v723 = vadd.f32 %v254, %v722
      %v724 = vpop.f32.mrb[0].mxu0
      %725 = vmatprep.mubr.bf16.mxu0 0
      %726 = vmatmul.mubr.bf16.gmra.mrb[0].mxu0 %v501
      %v727 = vpop.f32.mrb[0].mxu0
      %v728 = vadd.f32 %v254, %v727
      %v729 = vpop.f32.mrb[0].mxu0
      %v730 = vpop.f32.mrb[0].mxu0
      %v731 = vadd.f32 %v254, %v730
      %v732 = vpop.f32.mrb[0].mxu0
      %733 = vmatprep.mubr.bf16.mxu0 0
      %734 = vmatmul.mubr.bf16.gmra.mrb[0].mxu0 %v504
      %v735 = vpop.f32.mrb[0].mxu0
      %v736 = vadd.f32 %v254, %v735
      %v737 = vpop.f32.mrb[0].mxu0
      %v738 = vpop.f32.mrb[0].mxu0
      %v739 = vadd.f32 %v254, %v738
      %v740 = vpop.f32.mrb[0].mxu0
      %741 = vmatprep.mubr.bf16.mxu0 0
      %742 = vmatmul.mubr.bf16.gmra.mrb[0].mxu0 %v507
      %v743 = vpop.f32.mrb[0].mxu0
      %v744 = vadd.f32 %v254, %v743
      %v745 = vpop.f32.mrb[0].mxu0
      %v746 = vpop.f32.mrb[0].mxu0
      %v747 = vadd.f32 %v254, %v746
      %v748 = vpop.f32.mrb[0].mxu0
      %749 = vmatprep.mubr.bf16.mxu0 0
      %750 = vmatmul.mubr.bf16.gmra.mrb[0].mxu0 %v510
      %v751 = vpop.f32.mrb[0].mxu0
      %v752 = vadd.f32 %v254, %v751
      %v753 = vpop.f32.mrb[0].mxu0
      %v754 = vpop.f32.mrb[0].mxu0
      %v755 = vadd.f32 %v254, %v754
      %v756 = vpop.f32.mrb[0].mxu0
      %757 = vmatprep.mubr.bf16.mxu0 0
      %758 = vmatmul.mubr.bf16.gmra.mrb[0].mxu0 %v513
      %v759 = vpop.f32.mrb[0].mxu0
      %v760 = vadd.f32 %v254, %v759
      %v761 = vpop.f32.mrb[0].mxu0
      %v762 = vpop.f32.mrb[0].mxu0
      %v763 = vadd.f32 %v254, %v762
      %v764 = vpop.f32.mrb[0].mxu0
      %765 = vmatprep.mubr.bf16.mxu0 0
      %766 = vmatmul.mubr.bf16.gmra.mrb[0].mxu0 %v516
      %v767 = vpop.f32.mrb[0].mxu0
      %v768 = vadd.f32 %v254, %v767
      %v769 = vpop.f32.mrb[0].mxu0
      %v770 = vpop.f32.mrb[0].mxu0
      %v771 = vadd.f32 %v254, %v770
      %v772 = vpop.f32.mrb[0].mxu0
      %773 = vmatprep.mubr.bf16.mxu0 0
      %774 = vmatmul.mubr.bf16.gmra.mrb[0].mxu0 %v519
      %v775 = vpop.f32.mrb[0].mxu0
      %v776 = vadd.f32 %v254, %v775
      %v777 = vpop.f32.mrb[0].mxu0
      %v778 = vpop.f32.mrb[0].mxu0
      %v779 = vadd.f32 %v254, %v778
      %v780 = vpop.f32.mrb[0].mxu0
      %781 = vmatprep.mubr.bf16.mxu0 0
      %782 = vmatmul.mubr.bf16.gmra.mrb[0].mxu0 %v522
      %v783 = vpop.f32.mrb[0].mxu0
      %v784 = vadd.f32 %v254, %v783
      %v785 = vpop.f32.mrb[0].mxu0
      %v786 = vpop.f32.mrb[0].mxu0
      %v787 = vadd.f32 %v254, %v786
      %v788 = vpop.f32.mrb[0].mxu0
      %789 = vmatprep.mubr.bf16.mxu0 0
      %790 = vmatmul.mubr.bf16.gmra.mrb[0].mxu0 %v525
      %v791 = vpop.f32.mrb[0].mxu0
      %v792 = vadd.f32 %v254, %v791
      %v793 = vpop.f32.mrb[0].mxu0
      %v794 = vpop.f32.mrb[0].mxu0
      %v795 = vadd.f32 %v254, %v794
      %v796 = vpop.f32.mrb[0].mxu0
      %797 = vmatprep.mubr.bf16.mxu0 0
      %798 = vmatmul.mubr.bf16.gmra.mrb[0].mxu0 %v528
      %v799 = vpop.f32.mrb[0].mxu0
      %v800 = vadd.f32 %v254, %v799
      %v801 = vpop.f32.mrb[0].mxu0
      %v802 = vpop.f32.mrb[0].mxu0
      %v803 = vadd.f32 %v254, %v802
      %v804 = vpop.f32.mrb[0].mxu0
      %805 = vmatprep.mubr.bf16.mxu0 0
      %806 = vmatmul.mubr.bf16.gmra.mrb[0].mxu0 %v531
      %v807 = vpop.f32.mrb[0].mxu0
      %v808 = vadd.f32 %v254, %v807
      %v809 = vpop.f32.mrb[0].mxu0
      %v810 = vpop.f32.mrb[0].mxu0
      %v811 = vadd.f32 %v254, %v810
      %v812 = vpop.f32.mrb[0].mxu0
      %813 = vmatprep.mubr.bf16.mxu0 0
      %814 = vmatmul.mubr.bf16.gmra.mrb[0].mxu0 %v534
      %v815 = vpop.f32.mrb[0].mxu0
      %v816 = vadd.f32 %v254, %v815
      %v817 = vpop.f32.mrb[0].mxu0
      %v818 = vpop.f32.mrb[0].mxu0
      %v819 = vadd.f32 %v254, %v818
      %v820 = vpop.f32.mrb[0].mxu0
      %821 = vmatprep.mubr.bf16.mxu0 0
      %822 = vmatmul.mubr.bf16.gmra.mrb[0].mxu0 %v537
      %v823 = vpop.f32.mrb[0].mxu0
      %v824 = vadd.f32 %v254, %v823
      %v825 = vpop.f32.mrb[0].mxu0
      %v826 = vpop.f32.mrb[0].mxu0
      %v827 = vadd.f32 %v254, %v826
      %v828 = vpop.f32.mrb[0].mxu0
      %829 = vmatprep.mubr.bf16.mxu0 0
      %830 = vmatmul.mubr.bf16.gmra.mrb[0].mxu0 %v540
      %v831 = vpop.f32.mrb[0].mxu0
      %v832 = vadd.f32 %v254, %v831
      %v833 = vpop.f32.mrb[0].mxu0
      %v834 = vpop.f32.mrb[0].mxu0
      %v835 = vadd.f32 %v254, %v834
      %v836 = vpop.f32.mrb[0].mxu0
      %837 = vdwg.mxu0
      %v838 = vmax.f32 %v584, 0.0
      %v839 = vmax.f32 %v587, 0.0
      %v840 = vmax.f32 %v592, 0.0
      %v841 = vmax.f32 %v595, 0.0
      %v842 = vmax.f32 %v600, 0.0
      %v843 = vmax.f32 %v603, 0.0
      %v844 = vmax.f32 %v608, 0.0
      %v845 = vmax.f32 %v611, 0.0
      %v846 = vmax.f32 %v616, 0.0
      %v847 = vmax.f32 %v619, 0.0
      %v848 = vmax.f32 %v624, 0.0
      %v849 = vmax.f32 %v627, 0.0
      %v850 = vmax.f32 %v632, 0.0
      %v851 = vmax.f32 %v635, 0.0
      %v852 = vmax.f32 %v640, 0.0
      %v853 = vmax.f32 %v643, 0.0
      %v854 = vmax.f32 %v648, 0.0
      %v855 = vmax.f32 %v651, 0.0
      %v856 = vmax.f32 %v656, 0.0
      %v857 = vmax.f32 %v659, 0.0
      %v858 = vmax.f32 %v664, 0.0
      %v859 = vmax.f32 %v667, 0.0
      %v860 = vmax.f32 %v672, 0.0
      %v861 = vmax.f32 %v675, 0.0
      %v862 = vmax.f32 %v680, 0.0
      %v863 = vmax.f32 %v683, 0.0
      %v864 = vmax.f32 %v688, 0.0
      %v865 = vmax.f32 %v691, 0.0
      %v866 = vmax.f32 %v696, 0.0
      %v867 = vmax.f32 %v699, 0.0
      %v868 = vmax.f32 %v704, 0.0
      %v869 = vmax.f32 %v707, 0.0
      %v870 = vmax.f32 %v712, 0.0
      %v871 = vmax.f32 %v715, 0.0
      %v872 = vmax.f32 %v720, 0.0
      %v873 = vmax.f32 %v723, 0.0
      %v874 = vmax.f32 %v728, 0.0
      %v875 = vmax.f32 %v731, 0.0
      %v876 = vmax.f32 %v736, 0.0
      %v877 = vmax.f32 %v739, 0.0
      %v878 = vmax.f32 %v744, 0.0
      %v879 = vmax.f32 %v747, 0.0
      %v880 = vmax.f32 %v752, 0.0
      %v881 = vmax.f32 %v755, 0.0
      %v882 = vmax.f32 %v760, 0.0
      %v883 = vmax.f32 %v763, 0.0
      %v884 = vmax.f32 %v768, 0.0
      %v885 = vmax.f32 %v771, 0.0
      %v886 = vmax.f32 %v776, 0.0
      %v887 = vmax.f32 %v779, 0.0
      %v888 = vmax.f32 %v784, 0.0
      %v889 = vmax.f32 %v787, 0.0
      %v890 = vmax.f32 %v792, 0.0
      %v891 = vmax.f32 %v795, 0.0
      %v892 = vmax.f32 %v800, 0.0
      %v893 = vmax.f32 %v803, 0.0
      %v894 = vmax.f32 %v808, 0.0
      %v895 = vmax.f32 %v811, 0.0
      %v896 = vmax.f32 %v816, 0.0
      %v897 = vmax.f32 %v819, 0.0
      %v898 = vmax.f32 %v824, 0.0
      %v899 = vmax.f32 %v827, 0.0
      %v900 = vmax.f32 %v832, 0.0
      %v901 = vmax.f32 %v835, 0.0
      %v902 = vpack.c.bf16 %v839, %v838
      %v903 = vpack.c.bf16 %v841, %v840
      %v904 = vpack.c.bf16 %v843, %v842
      %v905 = vpack.c.bf16 %v845, %v844
      %v906 = vpack.c.bf16 %v847, %v846
      %v907 = vpack.c.bf16 %v849, %v848
      %v908 = vpack.c.bf16 %v851, %v850
      %v909 = vpack.c.bf16 %v853, %v852
      %v910 = vpack.c.bf16 %v855, %v854
      %v911 = vpack.c.bf16 %v857, %v856
      %v912 = vpack.c.bf16 %v859, %v858
      %v913 = vpack.c.bf16 %v861, %v860
      %v914 = vpack.c.bf16 %v863, %v862
      %v915 = vpack.c.bf16 %v865, %v864
      %v916 = vpack.c.bf16 %v867, %v866
      %v917 = vpack.c.bf16 %v869, %v868
      %v918 = vpack.c.bf16 %v871, %v870
      %v919 = vpack.c.bf16 %v873, %v872
      %v920 = vpack.c.bf16 %v875, %v874
      %v921 = vpack.c.bf16 %v877, %v876
      %v922 = vpack.c.bf16 %v879, %v878
      %v923 = vpack.c.bf16 %v881, %v880
      %v924 = vpack.c.bf16 %v883, %v882
      %v925 = vpack.c.bf16 %v885, %v884
      %v926 = vpack.c.bf16 %v887, %v886
      %v927 = vpack.c.bf16 %v889, %v888
      %v928 = vpack.c.bf16 %v891, %v890
      %v929 = vpack.c.bf16 %v893, %v892
      %v930 = vpack.c.bf16 %v895, %v894
      %v931 = vpack.c.bf16 %v897, %v896
      %v932 = vpack.c.bf16 %v899, %v898
      %v933 = vpack.c.bf16 %v901, %v900
      %v966 = vunpack.c.l.b16 %v902
      %v967 = vunpack.c.h.b16 %v902
      %v968 = vunpack.c.l.b16 %v903
      %v969 = vunpack.c.h.b16 %v903
      %v970 = vunpack.c.l.b16 %v904
      %v971 = vunpack.c.h.b16 %v904
      %v972 = vunpack.c.l.b16 %v905
      %v973 = vunpack.c.h.b16 %v905
      %v974 = vunpack.c.l.b16 %v906
      %v975 = vunpack.c.h.b16 %v906
      %v976 = vunpack.c.l.b16 %v907
      %v977 = vunpack.c.h.b16 %v907
      %v978 = vunpack.c.l.b16 %v908
      %v979 = vunpack.c.h.b16 %v908
      %v980 = vunpack.c.l.b16 %v909
      %v981 = vunpack.c.h.b16 %v909
      %v982 = vunpack.c.l.b16 %v910
      %v983 = vunpack.c.h.b16 %v910
      %v984 = vunpack.c.l.b16 %v911
      %v985 = vunpack.c.h.b16 %v911
      %v986 = vunpack.c.l.b16 %v912
      %v987 = vunpack.c.h.b16 %v912
      %v988 = vunpack.c.l.b16 %v913
      %v989 = vunpack.c.h.b16 %v913
      %v990 = vunpack.c.l.b16 %v914
      %v991 = vunpack.c.h.b16 %v914
      %v992 = vunpack.c.l.b16 %v915
      %v993 = vunpack.c.h.b16 %v915
      %v994 = vunpack.c.l.b16 %v916
      %v995 = vunpack.c.h.b16 %v916
      %v996 = vunpack.c.l.b16 %v917
      %v997 = vunpack.c.h.b16 %v917
      %v998 = vunpack.c.l.b16 %v918
      %v999 = vunpack.c.h.b16 %v918
      %v1000 = vunpack.c.l.b16 %v919
      %v1001 = vunpack.c.h.b16 %v919
      %v1002 = vunpack.c.l.b16 %v920
      %v1003 = vunpack.c.h.b16 %v920
      %v1004 = vunpack.c.l.b16 %v921
      %v1005 = vunpack.c.h.b16 %v921
      %v1006 = vunpack.c.l.b16 %v922
      %v1007 = vunpack.c.h.b16 %v922
      %v1008 = vunpack.c.l.b16 %v923
      %v1009 = vunpack.c.h.b16 %v923
      %v1010 = vunpack.c.l.b16 %v924
      %v1011 = vunpack.c.h.b16 %v924
      %v1012 = vunpack.c.l.b16 %v925
      %v1013 = vunpack.c.h.b16 %v925
      %v1014 = vunpack.c.l.b16 %v926
      %v1015 = vunpack.c.h.b16 %v926
      %v1016 = vunpack.c.l.b16 %v927
      %v1017 = vunpack.c.h.b16 %v927
      %v1018 = vunpack.c.l.b16 %v928
      %v1019 = vunpack.c.h.b16 %v928
      %v1020 = vunpack.c.l.b16 %v929
      %v1021 = vunpack.c.h.b16 %v929
      %v1022 = vunpack.c.l.b16 %v930
      %v1023 = vunpack.c.h.b16 %v930
      %v1024 = vunpack.c.l.b16 %v931
      %v1025 = vunpack.c.h.b16 %v931
      %v1026 = vunpack.c.l.b16 %v932
      %v1027 = vunpack.c.h.b16 %v932
      %v1028 = vunpack.c.l.b16 %v933
      %v1029 = vunpack.c.h.b16 %v933
      %v1030 = vpack.c.b16 %v966, %v966
      %v1031 = vpack.c.b16 %v967, %v967
      %v1032 = vpack.c.b16 %v968, %v968
      %v1033 = vpack.c.b16 %v969, %v969
      %v1034 = vpack.c.b16 %v970, %v970
      %v1035 = vpack.c.b16 %v971, %v971
      %v1036 = vpack.c.b16 %v972, %v972
      %v1037 = vpack.c.b16 %v973, %v973
      %v1038 = vpack.c.b16 %v974, %v974
      %v1039 = vpack.c.b16 %v975, %v975
      %v1040 = vpack.c.b16 %v976, %v976
      %v1041 = vpack.c.b16 %v977, %v977
      %v1042 = vpack.c.b16 %v978, %v978
      %v1043 = vpack.c.b16 %v979, %v979
      %v1044 = vpack.c.b16 %v980, %v980
      %v1045 = vpack.c.b16 %v981, %v981
      %v1046 = vpack.c.b16 %v982, %v982
      %v1047 = vpack.c.b16 %v983, %v983
      %v1048 = vpack.c.b16 %v984, %v984
      %v1049 = vpack.c.b16 %v985, %v985
      %v1050 = vpack.c.b16 %v986, %v986
      %v1051 = vpack.c.b16 %v987, %v987
      %v1052 = vpack.c.b16 %v988, %v988
      %v1053 = vpack.c.b16 %v989, %v989
      %v1054 = vpack.c.b16 %v990, %v990
      %v1055 = vpack.c.b16 %v991, %v991
      %v1056 = vpack.c.b16 %v992, %v992
      %v1057 = vpack.c.b16 %v993, %v993
      %v1058 = vpack.c.b16 %v994, %v994
      %v1059 = vpack.c.b16 %v995, %v995
      %v1060 = vpack.c.b16 %v996, %v996
      %v1061 = vpack.c.b16 %v997, %v997
      %v1062 = vpack.c.b16 %v998, %v998
      %v1063 = vpack.c.b16 %v999, %v999
      %v1064 = vpack.c.b16 %v1000, %v1000
      %v1065 = vpack.c.b16 %v1001, %v1001
      %v1066 = vpack.c.b16 %v1002, %v1002
      %v1067 = vpack.c.b16 %v1003, %v1003
      %v1068 = vpack.c.b16 %v1004, %v1004
      %v1069 = vpack.c.b16 %v1005, %v1005
      %v1070 = vpack.c.b16 %v1006, %v1006
      %v1071 = vpack.c.b16 %v1007, %v1007
      %v1072 = vpack.c.b16 %v1008, %v1008
      %v1073 = vpack.c.b16 %v1009, %v1009
      %v1074 = vpack.c.b16 %v1010, %v1010
      %v1075 = vpack.c.b16 %v1011, %v1011
      %v1076 = vpack.c.b16 %v1012, %v1012
      %v1077 = vpack.c.b16 %v1013, %v1013
      %v1078 = vpack.c.b16 %v1014, %v1014
      %v1079 = vpack.c.b16 %v1015, %v1015
      %v1080 = vpack.c.b16 %v1016, %v1016
      %v1081 = vpack.c.b16 %v1017, %v1017
      %v1082 = vpack.c.b16 %v1018, %v1018
      %v1083 = vpack.c.b16 %v1019, %v1019
      %v1084 = vpack.c.b16 %v1020, %v1020
      %v1085 = vpack.c.b16 %v1021, %v1021
      %v1086 = vpack.c.b16 %v1022, %v1022
      %v1087 = vpack.c.b16 %v1023, %v1023
      %v1088 = vpack.c.b16 %v1024, %v1024
      %v1089 = vpack.c.b16 %v1025, %v1025
      %v1090 = vpack.c.b16 %v1026, %v1026
      %v1091 = vpack.c.b16 %v1027, %v1027
      %v1092 = vpack.c.b16 %v1028, %v1028
      %v1093 = vpack.c.b16 %v1029, %v1029
      %1158 = vst [vmem:[%s172] sm:$0xf] %v1030
      %1159 = vst [vmem:[%s172 + $0x4] sm:$0xf] %v1031
      %1160 = vst [vmem:[%s172 + $0x8] sm:$0xf] %v1032
      %1161 = vst [vmem:[%s172 + $0xc] sm:$0xf] %v1033
      %1162 = vst [vmem:[%s172 + $0x10] sm:$0xf] %v1034
      %1163 = vst [vmem:[%s172 + $0x14] sm:$0xf] %v1035
      %1164 = vst [vmem:[%s172 + $0x18] sm:$0xf] %v1036
      %1165 = vst [vmem:[%s172 + $0x1c] sm:$0xf] %v1037
      %1166 = vst [vmem:[%s172 + $0x20] sm:$0xf] %v1038
      %1167 = vst [vmem:[%s172 + $0x24] sm:$0xf] %v1039
      %1168 = vst [vmem:[%s172 + $0x28] sm:$0xf] %v1040
      %1169 = vst [vmem:[%s172 + $0x2c] sm:$0xf] %v1041
      %1170 = vst [vmem:[%s172 + $0x30] sm:$0xf] %v1042
      %1171 = vst [vmem:[%s172 + $0x34] sm:$0xf] %v1043
      %1172 = vst [vmem:[%s172 + $0x38] sm:$0xf] %v1044
      %1173 = vst [vmem:[%s172 + $0x3c] sm:$0xf] %v1045
      %1174 = vst [vmem:[%s172 + $0x40] sm:$0xf] %v1046
      %1175 = vst [vmem:[%s172 + $0x44] sm:$0xf] %v1047
      %1176 = vst [vmem:[%s172 + $0x48] sm:$0xf] %v1048
      %1177 = vst [vmem:[%s172 + $0x4c] sm:$0xf] %v1049
      %1178 = vst [vmem:[%s172 + $0x50] sm:$0xf] %v1050
      %1179 = vst [vmem:[%s172 + $0x54] sm:$0xf] %v1051
      %1180 = vst [vmem:[%s172 + $0x58] sm:$0xf] %v1052
      %1181 = vst [vmem:[%s172 + $0x5c] sm:$0xf] %v1053
      %1182 = vst [vmem:[%s172 + $0x60] sm:$0xf] %v1054
      %1183 = vst [vmem:[%s172 + $0x64] sm:$0xf] %v1055
      %1184 = vst [vmem:[%s172 + $0x68] sm:$0xf] %v1056
      %1185 = vst [vmem:[%s172 + $0x6c] sm:$0xf] %v1057
      %1186 = vst [vmem:[%s172 + $0x70] sm:$0xf] %v1058
      %1187 = vst [vmem:[%s172 + $0x74] sm:$0xf] %v1059
      %1188 = vst [vmem:[%s172 + $0x78] sm:$0xf] %v1060
      %1189 = vst [vmem:[%s172 + $0x7c] sm:$0xf] %v1061
      %1190 = vst [vmem:[%s172 + $0x80] sm:$0xf] %v1062
      %1191 = vst [vmem:[%s172 + $0x84] sm:$0xf] %v1063
      %1192 = vst [vmem:[%s172 + $0x88] sm:$0xf] %v1064
      %1193 = vst [vmem:[%s172 + $0x8c] sm:$0xf] %v1065
      %1194 = vst [vmem:[%s172 + $0x90] sm:$0xf] %v1066
      %1195 = vst [vmem:[%s172 + $0x94] sm:$0xf] %v1067
      %1196 = vst [vmem:[%s172 + $0x98] sm:$0xf] %v1068
      %1197 = vst [vmem:[%s172 + $0x9c] sm:$0xf] %v1069
      %1198 = vst [vmem:[%s172 + $0xa0] sm:$0xf] %v1070
      %1199 = vst [vmem:[%s172 + $0xa4] sm:$0xf] %v1071
      %1200 = vst [vmem:[%s172 + $0xa8] sm:$0xf] %v1072
      %1201 = vst [vmem:[%s172 + $0xac] sm:$0xf] %v1073
      %1202 = vst [vmem:[%s172 + $0xb0] sm:$0xf] %v1074
      %1203 = vst [vmem:[%s172 + $0xb4] sm:$0xf] %v1075
      %1204 = vst [vmem:[%s172 + $0xb8] sm:$0xf] %v1076
      %1205 = vst [vmem:[%s172 + $0xbc] sm:$0xf] %v1077
      %1206 = vst [vmem:[%s172 + $0xc0] sm:$0xf] %v1078
      %1207 = vst [vmem:[%s172 + $0xc4] sm:$0xf] %v1079
      %1208 = vst [vmem:[%s172 + $0xc8] sm:$0xf] %v1080
      %1209 = vst [vmem:[%s172 + $0xcc] sm:$0xf] %v1081
      %1210 = vst [vmem:[%s172 + $0xd0] sm:$0xf] %v1082
      %1211 = vst [vmem:[%s172 + $0xd4] sm:$0xf] %v1083
      %1212 = vst [vmem:[%s172 + $0xd8] sm:$0xf] %v1084
      %1213 = vst [vmem:[%s172 + $0xdc] sm:$0xf] %v1085
      %1214 = vst [vmem:[%s172 + $0xe0] sm:$0xf] %v1086
      %1215 = vst [vmem:[%s172 + $0xe4] sm:$0xf] %v1087
      %1216 = vst [vmem:[%s172 + $0xe8] sm:$0xf] %v1088
      %1217 = vst [vmem:[%s172 + $0xec] sm:$0xf] %v1089
      %1218 = vst [vmem:[%s172 + $0xf0] sm:$0xf] %v1090
      %1219 = vst [vmem:[%s172 + $0xf4] sm:$0xf] %v1091
      %1220 = vst [vmem:[%s172 + $0xf8] sm:$0xf] %v1092
      %1221 = vst [vmem:[%s172 + $0xfc] sm:$0xf] %v1093
      %s1222 = smul.u32 64, %s14
      %p1223 = scmp.lt.s32.totalorder %s1222, 255
      %s1224 = scalar_select %p1223, %s1222, 255
      %s1225 = smul.addr %s1224, 4
      %s1226 = scalar_lea.vmem %s3, %s1225
      // Predicated region
      $region33: #{trashnet_forward.5} parent=31 // pred_check
        %p1227 = pneg %p100
      $region34: #{trashnet_forward.5} parent=31 // pred_check_branch
        %1229 = sbr.rel (%p1227) target = $region36
      $region35: #{trashnet_forward.5} parent=31 // pred_region
        %s1230 = smul.u32 64, %s14
      $region36: #{trashnet_forward.5} parent=31 // pred_fallthru
        _
    $region32: #{trashnet_forward.5} parent=5 // pred_fallthru
      _
    %p1231 = scmp.le.s32.totalorder 2, %s9
    // Predicated region
    $region37: #{trashnet_forward.5} parent=5 // pred_check
      %p1232 = pneg %p1231
    $region38: #{trashnet_forward.5} parent=5 // pred_check_branch
      %1234 = sbr.rel (%p1232) target = $region40
    $region39: #{trashnet_forward.5} parent=5 // pred_region
      %s1235 = ssub.s32 %s9, 2
      // Predicated region
      $region41: #{trashnet_forward.5} parent=39 // pred_check
        %p1236 = pneg %p106
      $region42: #{trashnet_forward.5} parent=39 // pred_check_branch
        %1238 = sbr.rel (%p1236) target = $region44
      $region43: #{trashnet_forward.5} parent=39 // pred_region
        %s1239 = smul.u32 64, %s15
        %p1240 = scmp.lt.s32.totalorder %s1239, 255
        %s1241 = scalar_select %p1240, %s1239, 255
        %s1242 = smul.addr %s1241, 4
        %s1243 = scalar_lea.vmem %s3, %s1242
      $region44: #{trashnet_forward.5} parent=39 // pred_fallthru
        _
    $region40: #{trashnet_forward.5} parent=5 // pred_fallthru
      _
  $region6: #{trashnet_forward.5} parent=0 // loop_footer
    %s13 = sadd.s32 1, %s9
  $region7: #{trashnet_forward.5} parent=0 // loop_footer_branch
    %8 = sbr.rel target = $region3
  $region8: #{trashnet_forward.5} parent=0 // loop_exit
    _

// kernel: trashnet_forward.6
$region0: #{trashnet_forward.6}
  #allocation0 [shape = 'u32[]', space=smem, size = 0x4, offset = 0x4, fixed_abs, tag = 'smem constant byte address 0x4 - core index']
  #allocation1 [shape = 'u32[144,128]{1,0:T(1,128)}', space=vmem, size = 0x12000, scoped, tag = 'internal scratch']
  %s0 = inlined_call_operand.vmem [shape: bf16[2,14,2,14,256], index: 0, kind: input, shape index: {}]
  %s1 = inlined_call_operand.vmem [shape: bf16[2,14,14,128], index: 1, kind: output, shape index: {}]
  %s2 = sld [smem:[#allocation0]]
  $region37: #{trashnet_forward.6} parent=0
    _
  %s4 = ssub.s32 1, %s2
  %s5 = scalar_select 0, %s4, %s2
  loop: start=0, step=1, limit=4
  $region2: #{trashnet_forward.6} parent=0 // loop_pre_header
    _
  $region3: #{trashnet_forward.6} parent=0 // loop_header
    %s7 = sphi 0, %s11
    %p8 = scmp.ge.s32.totalorder %s7, 4
    %s17 = sphi 0, %s19
    %s20 = sphi 0, %s17
    %s21 = sphi 0, %s20
    %s37 = sphi 0, %s21
    %s43 = sphi 0, %s45
    %s46 = sphi 0, %s43
    %s47 = sphi 0, %s46
    %s63 = sphi 0, %s47
  $region4: #{trashnet_forward.6} parent=0 // loop_header_branch
    %10 = sbr.rel (%p8) target = $region8
  $region5: #{trashnet_forward.6} parent=0 // loop_body
    %s12 = ssub.s32 %s7, 1
    %s13 = ssub.s32 %s7, 2
    %s14 = sadd.s32 %s7, 1
    %s15 = ssub.s32 %s7, %s14
    %p16 = scmp.eq.s32.totalorder %s15, 0
    %s18 = sadd.s32 %s17, 1
    %s19 = scalar_select %p16, %s17, %s18
    %p22 = pneg %p16
    %p23 = scmp.eq.s32.totalorder %s7, 1
    %p24 = por %p22, %p23
    %p25 = scmp.ne.s32.totalorder %s17, %s20
    %p26 = scmp.eq.s32.totalorder %s7, 0
    %p27 = por %p25, %p26
    %p28 = scmp.ne.s32.totalorder %s17, %s20
    %p29 = scmp.eq.s32.totalorder %s12, 1
    %p30 = por %p28, %p29
    %p31 = scmp.ne.s32.totalorder %s20, %s21
    %p32 = scmp.eq.s32.totalorder %s12, 0
    %p33 = por %p31, %p32
    %p34 = scmp.ne.s32.totalorder %s20, %s21
    %p35 = scmp.eq.s32.totalorder %s13, 1
    %p36 = por %p34, %p35
    %p38 = scmp.ne.s32.totalorder %s21, %s37
    %p39 = scmp.eq.s32.totalorder %s13, 0
    %p40 = por %p38, %p39
    %s41 = ssub.s32 %s7, %s14
    %p42 = scmp.eq.s32.totalorder %s41, 0
    %s44 = sadd.s32 %s43, 1
    %s45 = scalar_select %p42, %s43, %s44
    %p48 = pneg %p42
    %p49 = scmp.eq.s32.totalorder %s7, 1
    %p50 = por %p48, %p49
    %p51 = scmp.ne.s32.totalorder %s43, %s46
    %p52 = scmp.eq.s32.totalorder %s7, 0
    %p53 = por %p51, %p52
    %p54 = scmp.ne.s32.totalorder %s43, %s46
    %p55 = scmp.eq.s32.totalorder %s12, 1
    %p56 = por %p54, %p55
    %p57 = scmp.ne.s32.totalorder %s46, %s47
    %p58 = scmp.eq.s32.totalorder %s12, 0
    %p59 = por %p57, %p58
    %p60 = scmp.ne.s32.totalorder %s46, %s47
    %p61 = scmp.eq.s32.totalorder %s13, 1
    %p62 = por %p60, %p61
    %p64 = scmp.ne.s32.totalorder %s47, %s63
    %p65 = scmp.eq.s32.totalorder %s13, 0
    %p66 = por %p64, %p65
    %p67 = scmp.le.s32.totalorder 1, %s7
    %p68 = scmp.lt.s32.totalorder %s7, 3
    %p69 = pnand %p67, %p68
    %p70 = pneg %p69
    // Predicated region
    $region9: #{trashnet_forward.6} parent=5 // pred_check
      _
    $region10: #{trashnet_forward.6} parent=5 // pred_check_branch
      %72 = sbr.rel (%p69) target = $region12
    $region11: #{trashnet_forward.6} parent=5 // pred_region
      %s73 = ssub.s32 %s7, 1
    $region12: #{trashnet_forward.6} parent=5 // pred_fallthru
      _
    %p74 = scmp.lt.s32.totalorder %s7, 2
    // Predicated region
    $region13: #{trashnet_forward.6} parent=5 // pred_check
      %p75 = pneg %p74
    $region14: #{trashnet_forward.6} parent=5 // pred_check_branch
      %77 = sbr.rel (%p75) target = $region16
    $region15: #{trashnet_forward.6} parent=5 // pred_region
      // Predicated region
      $region17: #{trashnet_forward.6} parent=15 // pred_check
        %p78 = pneg %p27
      $region18: #{trashnet_forward.6} parent=15 // pred_check_branch
        %80 = sbr.rel (%p78) target = $region20
      $region19: #{trashnet_forward.6} parent=15 // pred_region
        %p81 = scmp.lt.s32.totalorder %s7, 1
        %s82 = scalar_select %p81, %s7, 1
        %s83 = smul.addr %s82, 112
        %s84 = smul.addr %s83, 4
        %s85 = scalar_lea.vmem %s0, %s84
      $region20: #{trashnet_forward.6} parent=15 // pred_fallthru
        _
    $region16: #{trashnet_forward.6} parent=5 // pred_fallthru
      _
    %p86 = scmp.le.s32.totalorder 1, %s7
    %p87 = scmp.lt.s32.totalorder %s7, 3
    %p88 = pnand %p86, %p87
    %p89 = pneg %p88
    // Predicated region
    $region21: #{trashnet_forward.6} parent=5 // pred_check
      _
    $region22: #{trashnet_forward.6} parent=5 // pred_check_branch
      %91 = sbr.rel (%p88) target = $region24
    $region23: #{trashnet_forward.6} parent=5 // pred_region
      %s92 = ssub.s32 %s7, 1
      %p93 = scmp.lt.s32.totalorder %s12, 1
      %s94 = scalar_select %p93, %s12, 1
      %s95 = smul.addr %s94, 112
      %s96 = smul.addr %s95, 4
      %s97 = scalar_lea.vmem %s0, %s96
      %p98 = pneg %p33
      %p99 = pneg %p30
      %p100 = pneg %p59
      %p101 = pneg %p56
      %p102 = scmp.lt.s32.totalorder %s12, 1
      %s103 = scalar_select %p102, %s12, 1
      %s104 = smul.addr %s103, 28
      %s105 = smul.addr %s104, 4
      %s106 = scalar_lea.vmem %s1, %s105
      %p107 = scmp.lt.s32.totalorder %s12, 1
      %s108 = scalar_select %p107, %s12, 1
      %s109 = smul.addr %s108, 112
      %s110 = smul.addr %s109, 4
      %s111 = scalar_lea.vmem %s0, %s110
      %p112 = scmp.lt.s32.totalorder %s12, 1
      %s113 = scalar_select %p112, %s12, 1
      %s114 = smul.addr %s113, 28
      %s115 = smul.addr %s114, 4
      %s116 = scalar_lea.vmem %s1, %s115
      %v117 = vld [vmem:[%s111] sm:$0xff]
      %v118 = vld [vmem:[%s111 + $0x8] sm:$0x77]
      %v119 = vld [vmem:[%s111 + $0x10] sm:$0xff]
      %v120 = vld [vmem:[%s111 + $0x18] sm:$0x77]
      %v121 = vld [vmem:[%s111 + $0x20] sm:$0xff]
      %v122 = vld [vmem:[%s111 + $0x28] sm:$0x77]
      %v123 = vld [vmem:[%s111 + $0x30] sm:$0xff]
      %v124 = vld [vmem:[%s111 + $0x38] sm:$0x77]
      %v125 = vld [vmem:[%s111 + $0x40] sm:$0xff]
      %v126 = vld [vmem:[%s111 + $0x48] sm:$0x77]
      %v127 = vld [vmem:[%s111 + $0x50] sm:$0xff]
      %v128 = vld [vmem:[%s111 + $0x58] sm:$0x77]
      %v129 = vld [vmem:[%s111 + $0x60] sm:$0xff]
      %v130 = vld [vmem:[%s111 + $0x68] sm:$0x77]
      %v131 = vld [vmem:[%s111 + $0x70] sm:$0xff]
      %v132 = vld [vmem:[%s111 + $0x78] sm:$0x77]
      %v133 = vld [vmem:[%s111 + $0x80] sm:$0xff]
      %v134 = vld [vmem:[%s111 + $0x88] sm:$0x77]
      %v135 = vld [vmem:[%s111 + $0x90] sm:$0xff]
      %v136 = vld [vmem:[%s111 + $0x98] sm:$0x77]
      %v137 = vld [vmem:[%s111 + $0xa0] sm:$0xff]
      %v138 = vld [vmem:[%s111 + $0xa8] sm:$0x77]
      %v139 = vld [vmem:[%s111 + $0xb0] sm:$0xff]
      %v140 = vld [vmem:[%s111 + $0xb8] sm:$0x77]
      %v141 = vld [vmem:[%s111 + $0xc0] sm:$0xff]
      %v142 = vld [vmem:[%s111 + $0xc8] sm:$0x77]
      %v143 = vld [vmem:[%s111 + $0xd0] sm:$0xff]
      %v144 = vld [vmem:[%s111 + $0xd8] sm:$0x77]
      %v145 = vld [vmem:[%s111 + $0xe0] sm:$0xff]
      %v146 = vld [vmem:[%s111 + $0xe8] sm:$0x77]
      %v147 = vld [vmem:[%s111 + $0xf0] sm:$0xff]
      %v148 = vld [vmem:[%s111 + $0xf8] sm:$0x77]
      %v149 = vld [vmem:[%s111 + $0x100] sm:$0xff]
      %v150 = vld [vmem:[%s111 + $0x108] sm:$0x77]
      %v151 = vld [vmem:[%s111 + $0x110] sm:$0xff]
      %v152 = vld [vmem:[%s111 + $0x118] sm:$0x77]
      %v153 = vld [vmem:[%s111 + $0x120] sm:$0xff]
      %v154 = vld [vmem:[%s111 + $0x128] sm:$0x77]
      %v155 = vld [vmem:[%s111 + $0x130] sm:$0xff]
      %v156 = vld [vmem:[%s111 + $0x138] sm:$0x77]
      %v157 = vld [vmem:[%s111 + $0x140] sm:$0xff]
      %v158 = vld [vmem:[%s111 + $0x148] sm:$0x77]
      %v159 = vld [vmem:[%s111 + $0x150] sm:$0xff]
      %v160 = vld [vmem:[%s111 + $0x158] sm:$0x77]
      %v161 = vld [vmem:[%s111 + $0x160] sm:$0xff]
      %v162 = vld [vmem:[%s111 + $0x168] sm:$0x77]
      %v163 = vld [vmem:[%s111 + $0x170] sm:$0xff]
      %v164 = vld [vmem:[%s111 + $0x178] sm:$0x77]
      %v165 = vld [vmem:[%s111 + $0x180] sm:$0xff]
      %v166 = vld [vmem:[%s111 + $0x188] sm:$0x77]
      %v167 = vld [vmem:[%s111 + $0x190] sm:$0xff]
      %v168 = vld [vmem:[%s111 + $0x198] sm:$0x77]
      %v169 = vld [vmem:[%s111 + $0x1a0] sm:$0xff]
      %v170 = vld [vmem:[%s111 + $0x1a8] sm:$0x77]
      %v171 = vld [vmem:[%s111 + $0x1b0] sm:$0xff]
      %v172 = vld [vmem:[%s111 + $0x1b8] sm:$0x77]
      %v173 = vmax.bf16 %v117, %v119
      %v174 = vmax.bf16 %v118, %v120
      %v175 = vmax.bf16 %v121, %v123
      %v176 = vmax.bf16 %v122, %v124
      %v177 = vmax.bf16 %v125, %v127
      %v178 = vmax.bf16 %v126, %v128
      %v179 = vmax.bf16 %v129, %v131
      %v180 = vmax.bf16 %v130, %v132
      %v181 = vmax.bf16 %v133, %v135
      %v182 = vmax.bf16 %v134, %v136
      %v183 = vmax.bf16 %v137, %v139
      %v184 = vmax.bf16 %v138, %v140
      %v185 = vmax.bf16 %v141, %v143
      %v186 = vmax.bf16 %v142, %v144
      %v187 = vmax.bf16 %v145, %v147
      %v188 = vmax.bf16 %v146, %v148
      %v189 = vmax.bf16 %v149, %v151
      %v190 = vmax.bf16 %v150, %v152
      %v191 = vmax.bf16 %v153, %v155
      %v192 = vmax.bf16 %v154, %v156
      %v193 = vmax.bf16 %v157, %v159
      %v194 = vmax.bf16 %v158, %v160
      %v195 = vmax.bf16 %v161, %v163
      %v196 = vmax.bf16 %v162, %v164
      %v197 = vmax.bf16 %v165, %v167
      %v198 = vmax.bf16 %v166, %v168
      %v199 = vmax.bf16 %v169, %v171
      %v200 = vmax.bf16 %v170, %v172
      %v229 = vrot.slane %v173, 4
      %v230 = vrot.slane %v174, 4
      %v231 = vrot.slane %v175, 4
      %v232 = vrot.slane %v176, 4
      %v233 = vrot.slane %v177, 4
      %v234 = vrot.slane %v178, 4
      %v235 = vrot.slane %v179, 4
      %v236 = vrot.slane %v180, 4
      %v237 = vrot.slane %v181, 4
      %v238 = vrot.slane %v182, 4
      %v239 = vrot.slane %v183, 4
      %v240 = vrot.slane %v184, 4
      %v241 = vrot.slane %v185, 4
      %v242 = vrot.slane %v186, 4
      %v243 = vrot.slane %v187, 4
      %v244 = vrot.slane %v188, 4
      %v245 = vrot.slane %v189, 4
      %v246 = vrot.slane %v190, 4
      %v247 = vrot.slane %v191, 4
      %v248 = vrot.slane %v192, 4
      %v249 = vrot.slane %v193, 4
      %v250 = vrot.slane %v194, 4
      %v251 = vrot.slane %v195, 4
      %v252 = vrot.slane %v196, 4
      %v253 = vrot.slane %v197, 4
      %v254 = vrot.slane %v198, 4
      %v255 = vrot.slane %v199, 4
      %v256 = vrot.slane %v200, 4
      %v285 = vmax.bf16 %v173, %v229
      %v286 = vmax.bf16 %v174, %v230
      %v287 = vmax.bf16 %v175, %v231
      %v288 = vmax.bf16 %v176, %v232
      %v289 = vmax.bf16 %v177, %v233
      %v290 = vmax.bf16 %v178, %v234
      %v291 = vmax.bf16 %v179, %v235
      %v292 = vmax.bf16 %v180, %v236
      %v293 = vmax.bf16 %v181, %v237
      %v294 = vmax.bf16 %v182, %v238
      %v295 = vmax.bf16 %v183, %v239
      %v296 = vmax.bf16 %v184, %v240
      %v297 = vmax.bf16 %v185, %v241
      %v298 = vmax.bf16 %v186, %v242
      %v299 = vmax.bf16 %v187, %v243
      %v300 = vmax.bf16 %v188, %v244
      %v301 = vmax.bf16 %v189, %v245
      %v302 = vmax.bf16 %v190, %v246
      %v303 = vmax.bf16 %v191, %v247
      %v304 = vmax.bf16 %v192, %v248
      %v305 = vmax.bf16 %v193, %v249
      %v306 = vmax.bf16 %v194, %v250
      %v307 = vmax.bf16 %v195, %v251
      %v308 = vmax.bf16 %v196, %v252
      %v309 = vmax.bf16 %v197, %v253
      %v310 = vmax.bf16 %v198, %v254
      %v311 = vmax.bf16 %v199, %v255
      %v312 = vmax.bf16 %v200, %v256
      %313 = vst [vmem:[%s116] sm:$0xf] %v285
      %314 = vst [vmem:[%s116 + $0x4] sm:$0x7] %v286
      %315 = vst [vmem:[%s116 + $0x8] sm:$0xf] %v287
      %316 = vst [vmem:[%s116 + $0xc] sm:$0x7] %v288
      %317 = vst [vmem:[%s116 + $0x10] sm:$0xf] %v289
      %318 = vst [vmem:[%s116 + $0x14] sm:$0x7] %v290
      %319 = vst [vmem:[%s116 + $0x18] sm:$0xf] %v291
      %320 = vst [vmem:[%s116 + $0x1c] sm:$0x7] %v292
      %321 = vst [vmem:[%s116 + $0x20] sm:$0xf] %v293
      %322 = vst [vmem:[%s116 + $0x24] sm:$0x7] %v294
      %323 = vst [vmem:[%s116 + $0x28] sm:$0xf] %v295
      %324 = vst [vmem:[%s116 + $0x2c] sm:$0x7] %v296
      %325 = vst [vmem:[%s116 + $0x30] sm:$0xf] %v297
      %326 = vst [vmem:[%s116 + $0x34] sm:$0x7] %v298
      %327 = vst [vmem:[%s116 + $0x38] sm:$0xf] %v299
      %328 = vst [vmem:[%s116 + $0x3c] sm:$0x7] %v300
      %329 = vst [vmem:[%s116 + $0x40] sm:$0xf] %v301
      %330 = vst [vmem:[%s116 + $0x44] sm:$0x7] %v302
      %331 = vst [vmem:[%s116 + $0x48] sm:$0xf] %v303
      %332 = vst [vmem:[%s116 + $0x4c] sm:$0x7] %v304
      %333 = vst [vmem:[%s116 + $0x50] sm:$0xf] %v305
      %334 = vst [vmem:[%s116 + $0x54] sm:$0x7] %v306
      %335 = vst [vmem:[%s116 + $0x58] sm:$0xf] %v307
      %336 = vst [vmem:[%s116 + $0x5c] sm:$0x7] %v308
      %337 = vst [vmem:[%s116 + $0x60] sm:$0xf] %v309
      %338 = vst [vmem:[%s116 + $0x64] sm:$0x7] %v310
      %339 = vst [vmem:[%s116 + $0x68] sm:$0xf] %v311
      %340 = vst [vmem:[%s116 + $0x6c] sm:$0x7] %v312
      %p341 = scmp.lt.s32.totalorder %s12, 1
      %s342 = scalar_select %p341, %s12, 1
      %s343 = smul.addr %s342, 28
      %s344 = smul.addr %s343, 4
      %s345 = scalar_lea.vmem %s1, %s344
      // Predicated region
      $region25: #{trashnet_forward.6} parent=23 // pred_check
        %p346 = pneg %p56
      $region26: #{trashnet_forward.6} parent=23 // pred_check_branch
        %348 = sbr.rel (%p346) target = $region28
      $region27: #{trashnet_forward.6} parent=23 // pred_region
        _
      $region28: #{trashnet_forward.6} parent=23 // pred_fallthru
        _
    $region24: #{trashnet_forward.6} parent=5 // pred_fallthru
      _
    %p349 = scmp.le.s32.totalorder 2, %s7
    // Predicated region
    $region29: #{trashnet_forward.6} parent=5 // pred_check
      %p350 = pneg %p349
    $region30: #{trashnet_forward.6} parent=5 // pred_check_branch
      %352 = sbr.rel (%p350) target = $region32
    $region31: #{trashnet_forward.6} parent=5 // pred_region
      %s353 = ssub.s32 %s7, 2
      // Predicated region
      $region33: #{trashnet_forward.6} parent=31 // pred_check
        %p354 = pneg %p62
      $region34: #{trashnet_forward.6} parent=31 // pred_check_branch
        %356 = sbr.rel (%p354) target = $region36
      $region35: #{trashnet_forward.6} parent=31 // pred_region
        %p357 = scmp.lt.s32.totalorder %s13, 1
        %s358 = scalar_select %p357, %s13, 1
        %s359 = smul.addr %s358, 28
        %s360 = smul.addr %s359, 4
        %s361 = scalar_lea.vmem %s1, %s360
      $region36: #{trashnet_forward.6} parent=31 // pred_fallthru
        _
    $region32: #{trashnet_forward.6} parent=5 // pred_fallthru
      _
  $region6: #{trashnet_forward.6} parent=0 // loop_footer
    %s11 = sadd.s32 1, %s7
  $region7: #{trashnet_forward.6} parent=0 // loop_footer_branch
    %6 = sbr.rel target = $region3
  $region8: #{trashnet_forward.6} parent=0 // loop_exit
    _

// kernel: trashnet_forward.7
$region0: #{trashnet_forward.7}
  #allocation0 [shape = 'u32[]', space=smem, size = 0x4, offset = 0x4, fixed_abs, tag = 'smem constant byte address 0x4 - core index']
  #allocation1 [shape = 'u32[144,128]{1,0:T(1,128)}', space=vmem, size = 0x12000, scoped, tag = 'internal scratch']
  %s0 = inlined_call_operand.vmem [shape: bf16[200,150], index: 0, kind: input, shape index: {}]
  %s1 = inlined_call_operand.vmem [shape: bf16[150,128], index: 1, kind: input, shape index: {}]
  %s2 = inlined_call_operand.vmem [shape: f32[1,128], index: 2, kind: input, shape index: {}]
  %s3 = inlined_call_operand.vmem [shape: bf16[200,128], index: 3, kind: output, shape index: {}]
  %s4 = sld [smem:[#allocation0]]
  $region22: #{trashnet_forward.7} parent=0
    _
  %s6 = ssub.s32 1, %s4
  %s7 = scalar_select 0, %s6, %s4
  // Predicated region
  $region2: #{trashnet_forward.7} parent=0 // pred_check
    _
  $region3: #{trashnet_forward.7} parent=0 // pred_check_branch
    %9 = sbr.rel (0) target = $region5
  $region4: #{trashnet_forward.7} parent=0 // pred_region
    _
  $region5: #{trashnet_forward.7} parent=0 // pred_fallthru
    _
  // Predicated region
  $region6: #{trashnet_forward.7} parent=0 // pred_check
    _
  $region7: #{trashnet_forward.7} parent=0 // pred_check_branch
    %11 = sbr.rel (0) target = $region9
  $region8: #{trashnet_forward.7} parent=0 // pred_region
    _
  $region9: #{trashnet_forward.7} parent=0 // pred_fallthru
    _
  // Predicated region
  $region10: #{trashnet_forward.7} parent=0 // pred_check
    _
  $region11: #{trashnet_forward.7} parent=0 // pred_check_branch
    %13 = sbr.rel (0) target = $region13
  $region12: #{trashnet_forward.7} parent=0 // pred_region
    _
  $region13: #{trashnet_forward.7} parent=0 // pred_fallthru
    _
  %v15 = vld [vmem:[%s0] sm:$0xff]
  %v16 = vld [vmem:[%s0 + $0x8] sm:$0xff]
  %v17 = vld [vmem:[%s0 + $0x10] sm:$0xff]
  %v18 = vld [vmem:[%s0 + $0x18] sm:$0xff]
  %v19 = vld [vmem:[%s0 + $0x20] sm:$0xff]
  %v20 = vld [vmem:[%s0 + $0x28] sm:$0xff]
  %v21 = vld [vmem:[%s0 + $0x30] sm:$0xff]
  %v22 = vld [vmem:[%s0 + $0x38] sm:$0xff]
  %v23 = vld [vmem:[%s0 + $0x40] sm:$0xff]
  %v24 = vld [vmem:[%s0 + $0x48] sm:$0xff]
  %v25 = vld [vmem:[%s0 + $0x50] sm:$0xff]
  %v26 = vld [vmem:[%s0 + $0x58] sm:$0xff]
  %v27 = vld [vmem:[%s0 + $0x60] sm:$0xff]
  %v28 = vld [vmem:[%s0 + $0x68] sm:$0xff]
  %v29 = vld [vmem:[%s0 + $0x70] sm:$0xff]
  %v30 = vld [vmem:[%s0 + $0x78] sm:$0xff]
  %v31 = vld [vmem:[%s0 + $0x80] sm:$0xff]
  %v32 = vld [vmem:[%s0 + $0x88] sm:$0xff]
  %v33 = vld [vmem:[%s0 + $0x90] sm:$0xff]
  %v34 = vld [vmem:[%s0 + $0x98] sm:$0xff]
  %v35 = vld [vmem:[%s0 + $0xa0] sm:$0xff]
  %v36 = vld [vmem:[%s0 + $0xa8] sm:$0xff]
  %v37 = vld [vmem:[%s0 + $0xb0] sm:$0xff]
  %v38 = vld [vmem:[%s0 + $0xb8] sm:$0xff]
  %v39 = vld [vmem:[%s0 + $0xc0] sm:$0xff]
  %v40 = vld [vmem:[%s1] sm:$0xf]
  %v41 = vld [vmem:[%s1 + $0x4] sm:$0xf]
  %v42 = vld [vmem:[%s1 + $0x8] sm:$0xf]
  %v43 = vld [vmem:[%s1 + $0xc] sm:$0xf]
  %v44 = vld [vmem:[%s1 + $0x10] sm:$0xf]
  %v45 = vld [vmem:[%s1 + $0x14] sm:$0xf]
  %v46 = vld [vmem:[%s1 + $0x18] sm:$0xf]
  %v47 = vld [vmem:[%s1 + $0x1c] sm:$0xf]
  %v48 = vld [vmem:[%s1 + $0x20] sm:$0xf]
  %v49 = vld [vmem:[%s1 + $0x24] sm:$0xf]
  %v50 = vld [vmem:[%s1 + $0x28] sm:$0xf]
  %v51 = vld [vmem:[%s1 + $0x2c] sm:$0xf]
  %v52 = vld [vmem:[%s1 + $0x30] sm:$0xf]
  %v53 = vld [vmem:[%s1 + $0x34] sm:$0xf]
  %v54 = vld [vmem:[%s1 + $0x38] sm:$0xf]
  %v55 = vld [vmem:[%s1 + $0x3c] sm:$0xf]
  %v56 = vld [vmem:[%s1 + $0x40] sm:$0xf]
  %v57 = vld [vmem:[%s1 + $0x44] sm:$0xf]
  %v58 = vld [vmem:[%s1 + $0x48] sm:$0x7]
  %v59 = vld [vmem:[%s2] sm:$0x1]
  %v61 = vlaneseq
  %v62 = vshrl.u32 %v61, 7
  %v63 = vsub.s32 0, %v62
  %v64 = vrot.slane %v59, %v63
  %v91 = vunpack.c.l.b16 %v15
  %v92 = vunpack.c.h.b16 %v15
  %v93 = vunpack.c.l.b16 %v16
  %v94 = vunpack.c.h.b16 %v16
  %v95 = vunpack.c.l.b16 %v17
  %v96 = vunpack.c.h.b16 %v17
  %v97 = vunpack.c.l.b16 %v18
  %v98 = vunpack.c.h.b16 %v18
  %v99 = vunpack.c.l.b16 %v19
  %v100 = vunpack.c.h.b16 %v19
  %v101 = vunpack.c.l.b16 %v20
  %v102 = vunpack.c.h.b16 %v20
  %v103 = vunpack.c.l.b16 %v21
  %v104 = vunpack.c.h.b16 %v21
  %v105 = vunpack.c.l.b16 %v22
  %v106 = vunpack.c.h.b16 %v22
  %v107 = vunpack.c.l.b16 %v23
  %v108 = vunpack.c.h.b16 %v23
  %v109 = vunpack.c.l.b16 %v24
  %v110 = vunpack.c.h.b16 %v24
  %v111 = vunpack.c.l.b16 %v25
  %v112 = vunpack.c.h.b16 %v25
  %v113 = vunpack.c.l.b16 %v26
  %v114 = vunpack.c.h.b16 %v26
  %v115 = vunpack.c.l.b16 %v27
  %v116 = vunpack.c.h.b16 %v27
  %v117 = vunpack.c.l.b16 %v28
  %v118 = vunpack.c.h.b16 %v28
  %v119 = vunpack.c.l.b16 %v29
  %v120 = vunpack.c.h.b16 %v29
  %v121 = vunpack.c.l.b16 %v30
  %v122 = vunpack.c.h.b16 %v30
  %v123 = vunpack.c.l.b16 %v31
  %v124 = vunpack.c.h.b16 %v31
  %v125 = vunpack.c.l.b16 %v32
  %v126 = vunpack.c.h.b16 %v32
  %v127 = vunpack.c.l.b16 %v33
  %v128 = vunpack.c.h.b16 %v33
  %v129 = vunpack.c.l.b16 %v34
  %v130 = vunpack.c.h.b16 %v34
  %v131 = vunpack.c.l.b16 %v35
  %v132 = vunpack.c.h.b16 %v35
  %v133 = vunpack.c.l.b16 %v36
  %v134 = vunpack.c.h.b16 %v36
  %v135 = vunpack.c.l.b16 %v37
  %v136 = vunpack.c.h.b16 %v37
  %v137 = vunpack.c.l.b16 %v38
  %v138 = vunpack.c.h.b16 %v38
  %v139 = vunpack.c.l.b16 %v39
  %v140 = vunpack.c.h.b16 %v39
  %v141 = vpack.c.b16 %v93, %v91
  %v142 = vpack.c.b16 %v94, %v92
  %v143 = vpack.c.b16 %v97, %v95
  %v144 = vpack.c.b16 %v98, %v96
  %v145 = vpack.c.b16 %v101, %v99
  %v146 = vpack.c.b16 %v102, %v100
  %v147 = vpack.c.b16 %v105, %v103
  %v148 = vpack.c.b16 %v106, %v104
  %v149 = vpack.c.b16 %v109, %v107
  %v150 = vpack.c.b16 %v110, %v108
  %v151 = vpack.c.b16 %v113, %v111
  %v152 = vpack.c.b16 %v114, %v112
  %v153 = vpack.c.b16 %v117, %v115
  %v154 = vpack.c.b16 %v118, %v116
  %v155 = vpack.c.b16 %v121, %v119
  %v156 = vpack.c.b16 %v122, %v120
  %v157 = vpack.c.b16 %v125, %v123
  %v158 = vpack.c.b16 %v126, %v124
  %v159 = vpack.c.b16 %v129, %v127
  %v160 = vpack.c.b16 %v130, %v128
  %v161 = vpack.c.b16 %v133, %v131
  %v162 = vpack.c.b16 %v134, %v132
  %v163 = vpack.c.b16 %v137, %v135
  %v164 = vpack.c.b16 %v138, %v136
  %v165 = vpack.c.b16 %v139, %v139
  %v166 = vpack.c.b16 %v140, %v140
  %v199 = vunpack.c.l.b16 %v40
  %v200 = vunpack.c.l.b16 %v41
  %v201 = vunpack.c.l.b16 %v42
  %v202 = vunpack.c.l.b16 %v43
  %v203 = vunpack.c.l.b16 %v44
  %v204 = vunpack.c.l.b16 %v45
  %v205 = vunpack.c.l.b16 %v46
  %v206 = vunpack.c.l.b16 %v47
  %v207 = vunpack.c.l.b16 %v48
  %v208 = vunpack.c.l.b16 %v49
  %v209 = vunpack.c.l.b16 %v50
  %v210 = vunpack.c.l.b16 %v51
  %v211 = vunpack.c.l.b16 %v52
  %v212 = vunpack.c.l.b16 %v53
  %v213 = vunpack.c.l.b16 %v54
  %v214 = vunpack.c.l.b16 %v55
  %v215 = vunpack.c.l.b16 %v56
  %v216 = vunpack.c.l.b16 %v57
  %v217 = vunpack.c.l.b16 %v58
  %v218 = vpack.c.b16 %v200, %v199
  %v219 = vpack.c.b16 %v202, %v201
  %v220 = vpack.c.b16 %v204, %v203
  %v221 = vpack.c.b16 %v206, %v205
  %v222 = vpack.c.b16 %v208, %v207
  %v223 = vpack.c.b16 %v210, %v209
  %v224 = vpack.c.b16 %v212, %v211
  %v225 = vpack.c.b16 %v214, %v213
  %v226 = vpack.c.b16 %v216, %v215
  %v227 = vpack.c.b16 %v217, %v217
  %vm237 = vcmask 179200
  %v239 = vsel %vm237, %v142, 0
  %v242 = vsel %vm237, %v144, 0
  %v245 = vsel %vm237, %v146, 0
  %v248 = vsel %vm237, %v148, 0
  %v251 = vsel %vm237, %v150, 0
  %v254 = vsel %vm237, %v152, 0
  %v257 = vsel %vm237, %v154, 0
  %v260 = vsel %vm237, %v156, 0
  %v263 = vsel %vm237, %v158, 0
  %v266 = vsel %vm237, %v160, 0
  %v269 = vsel %vm237, %v162, 0
  %v272 = vsel %vm237, %v164, 0
  %v275 = vsel %vm237, %v166, 0
  %vm277 = vcmask 1042432
  %v279 = vsel %vm277, %v227, 0
  %281 = vmatprep.subr.bf16.mxu0 0
  %282 = vmatpush1.bf16.msra.mxu0 %v218
  %283 = vmatprep.subr.bf16.mxu0 0
  %284 = vmatpush1.bf16.msra.mxu0 %v219
  %285 = vmatprep.subr.bf16.mxu0 0
  %286 = vmatpush1.bf16.msra.mxu0 %v220
  %287 = vmatprep.subr.bf16.mxu0 0
  %288 = vmatpush1.bf16.msra.mxu0 %v221
  %289 = vmatprep.subr.bf16.mxu0 0
  %290 = vmatpush1.bf16.msra.mxu0 %v222
  %291 = vmatprep.subr.bf16.mxu0 0
  %292 = vmatpush1.bf16.msra.mxu0 %v223
  %293 = vmatprep.subr.bf16.mxu0 0
  %294 = vmatpush1.bf16.msra.mxu0 %v224
  %295 = vmatprep.subr.bf16.mxu0 0
  %296 = vmatpush1.bf16.msra.mxu0 %v225
  %297 = vmatprep.subr.bf16.mxu0 0
  %298 = vmatpush1.bf16.msra.mxu0 %v226
  %299 = vmatprep.subr.bf16.mxu0 0
  %300 = vmatpush1.bf16.msra.mxu0 %v279
  %301 = vmatprep.subr.bf16.mxu0 0
  %302 = vmatpush1.bf16.msra.mxu0 0
  %303 = vmatprep.subr.bf16.mxu0 0
  %304 = vmatpush1.bf16.msra.mxu0 0
  %305 = vmatprep.subr.bf16.mxu0 0
  %306 = vmatpush1.bf16.msra.mxu0 0
  %307 = vmatprep.subr.bf16.mxu0 0
  %308 = vmatpush1.bf16.msra.mxu0 0
  %309 = vmatprep.subr.bf16.mxu0 0
  %310 = vmatpush1.bf16.msra.mxu0 0
  %311 = vmatprep.subr.bf16.mxu0 0
  %312 = vmatpush1.bf16.msra.mxu0 0
  %313 = vmatprep.mubr.bf16.mxu0 %v239
  %314 = vmatmul.mubr.bf16.gmra.mrb[0].mxu0 %v141
  %v315 = vpop.f32.mrb[0].mxu0
  %v316 = vadd.f32 %v64, %v315
  %v317 = vpop.f32.mrb[0].mxu0
  %v318 = vpop.f32.mrb[0].mxu0
  %v319 = vadd.f32 %v64, %v318
  %v320 = vpop.f32.mrb[0].mxu0
  %321 = vmatprep.mubr.bf16.mxu0 %v242
  %322 = vmatmul.mubr.bf16.gmra.mrb[0].mxu0 %v143
  %v323 = vpop.f32.mrb[0].mxu0
  %v324 = vadd.f32 %v64, %v323
  %v325 = vpop.f32.mrb[0].mxu0
  %v326 = vpop.f32.mrb[0].mxu0
  %v327 = vadd.f32 %v64, %v326
  %v328 = vpop.f32.mrb[0].mxu0
  %329 = vmatprep.mubr.bf16.mxu0 %v245
  %330 = vmatmul.mubr.bf16.gmra.mrb[0].mxu0 %v145
  %v331 = vpop.f32.mrb[0].mxu0
  %v332 = vadd.f32 %v64, %v331
  %v333 = vpop.f32.mrb[0].mxu0
  %v334 = vpop.f32.mrb[0].mxu0
  %v335 = vadd.f32 %v64, %v334
  %v336 = vpop.f32.mrb[0].mxu0
  %337 = vmatprep.mubr.bf16.mxu0 %v248
  %338 = vmatmul.mubr.bf16.gmra.mrb[0].mxu0 %v147
  %v339 = vpop.f32.mrb[0].mxu0
  %v340 = vadd.f32 %v64, %v339
  %v341 = vpop.f32.mrb[0].mxu0
  %v342 = vpop.f32.mrb[0].mxu0
  %v343 = vadd.f32 %v64, %v342
  %v344 = vpop.f32.mrb[0].mxu0
  %345 = vmatprep.mubr.bf16.mxu0 %v251
  %346 = vmatmul.mubr.bf16.gmra.mrb[0].mxu0 %v149
  %v347 = vpop.f32.mrb[0].mxu0
  %v348 = vadd.f32 %v64, %v347
  %v349 = vpop.f32.mrb[0].mxu0
  %v350 = vpop.f32.mrb[0].mxu0
  %v351 = vadd.f32 %v64, %v350
  %v352 = vpop.f32.mrb[0].mxu0
  %353 = vmatprep.mubr.bf16.mxu0 %v254
  %354 = vmatmul.mubr.bf16.gmra.mrb[0].mxu0 %v151
  %v355 = vpop.f32.mrb[0].mxu0
  %v356 = vadd.f32 %v64, %v355
  %v357 = vpop.f32.mrb[0].mxu0
  %v358 = vpop.f32.mrb[0].mxu0
  %v359 = vadd.f32 %v64, %v358
  %v360 = vpop.f32.mrb[0].mxu0
  %361 = vmatprep.mubr.bf16.mxu0 %v257
  %362 = vmatmul.mubr.bf16.gmra.mrb[0].mxu0 %v153
  %v363 = vpop.f32.mrb[0].mxu0
  %v364 = vadd.f32 %v64, %v363
  %v365 = vpop.f32.mrb[0].mxu0
  %v366 = vpop.f32.mrb[0].mxu0
  %v367 = vadd.f32 %v64, %v366
  %v368 = vpop.f32.mrb[0].mxu0
  %369 = vmatprep.mubr.bf16.mxu0 %v260
  %370 = vmatmul.mubr.bf16.gmra.mrb[0].mxu0 %v155
  %v371 = vpop.f32.mrb[0].mxu0
  %v372 = vadd.f32 %v64, %v371
  %v373 = vpop.f32.mrb[0].mxu0
  %v374 = vpop.f32.mrb[0].mxu0
  %v375 = vadd.f32 %v64, %v374
  %v376 = vpop.f32.mrb[0].mxu0
  %377 = vmatprep.mubr.bf16.mxu0 %v263
  %378 = vmatmul.mubr.bf16.gmra.mrb[0].mxu0 %v157
  %v379 = vpop.f32.mrb[0].mxu0
  %v380 = vadd.f32 %v64, %v379
  %v381 = vpop.f32.mrb[0].mxu0
  %v382 = vpop.f32.mrb[0].mxu0
  %v383 = vadd.f32 %v64, %v382
  %v384 = vpop.f32.mrb[0].mxu0
  %385 = vmatprep.mubr.bf16.mxu0 %v266
  %386 = vmatmul.mubr.bf16.gmra.mrb[0].mxu0 %v159
  %v387 = vpop.f32.mrb[0].mxu0
  %v388 = vadd.f32 %v64, %v387
  %v389 = vpop.f32.mrb[0].mxu0
  %v390 = vpop.f32.mrb[0].mxu0
  %v391 = vadd.f32 %v64, %v390
  %v392 = vpop.f32.mrb[0].mxu0
  %393 = vmatprep.mubr.bf16.mxu0 %v269
  %394 = vmatmul.mubr.bf16.gmra.mrb[0].mxu0 %v161
  %v395 = vpop.f32.mrb[0].mxu0
  %v396 = vadd.f32 %v64, %v395
  %v397 = vpop.f32.mrb[0].mxu0
  %v398 = vpop.f32.mrb[0].mxu0
  %v399 = vadd.f32 %v64, %v398
  %v400 = vpop.f32.mrb[0].mxu0
  %401 = vmatprep.mubr.bf16.mxu0 %v272
  %402 = vmatmul.mubr.bf16.gmra.mrb[0].mxu0 %v163
  %v403 = vpop.f32.mrb[0].mxu0
  %v404 = vadd.f32 %v64, %v403
  %v405 = vpop.f32.mrb[0].mxu0
  %v406 = vpop.f32.mrb[0].mxu0
  %v407 = vadd.f32 %v64, %v406
  %v408 = vpop.f32.mrb[0].mxu0
  %409 = vmatprep.mubr.bf16.mxu0 %v275
  %410 = vmatmul.mubr.bf16.gmra.mrb[0].mxu0 %v165
  %v411 = vpop.f32.mrb[0].mxu0
  %v412 = vadd.f32 %v64, %v411
  %v413 = vpop.f32.mrb[0].mxu0
  %v414 = vpop.f32.mrb[0].mxu0
  %v415 = vpop.f32.mrb[0].mxu0
  %416 = vdwg.mxu0
  %v417 = vmax.f32 %v316, 0.0
  %v418 = vmax.f32 %v319, 0.0
  %v419 = vmax.f32 %v324, 0.0
  %v420 = vmax.f32 %v327, 0.0
  %v421 = vmax.f32 %v332, 0.0
  %v422 = vmax.f32 %v335, 0.0
  %v423 = vmax.f32 %v340, 0.0
  %v424 = vmax.f32 %v343, 0.0
  %v425 = vmax.f32 %v348, 0.0
  %v426 = vmax.f32 %v351, 0.0
  %v427 = vmax.f32 %v356, 0.0
  %v428 = vmax.f32 %v359, 0.0
  %v429 = vmax.f32 %v364, 0.0
  %v430 = vmax.f32 %v367, 0.0
  %v431 = vmax.f32 %v372, 0.0
  %v432 = vmax.f32 %v375, 0.0
  %v433 = vmax.f32 %v380, 0.0
  %v434 = vmax.f32 %v383, 0.0
  %v435 = vmax.f32 %v388, 0.0
  %v436 = vmax.f32 %v391, 0.0
  %v437 = vmax.f32 %v396, 0.0
  %v438 = vmax.f32 %v399, 0.0
  %v439 = vmax.f32 %v404, 0.0
  %v440 = vmax.f32 %v407, 0.0
  %v441 = vmax.f32 %v412, 0.0
  %v442 = vpack.c.bf16 %v418, %v417
  %v443 = vpack.c.bf16 %v420, %v419
  %v444 = vpack.c.bf16 %v422, %v421
  %v445 = vpack.c.bf16 %v424, %v423
  %v446 = vpack.c.bf16 %v426, %v425
  %v447 = vpack.c.bf16 %v428, %v427
  %v448 = vpack.c.bf16 %v430, %v429
  %v449 = vpack.c.bf16 %v432, %v431
  %v450 = vpack.c.bf16 %v434, %v433
  %v451 = vpack.c.bf16 %v436, %v435
  %v452 = vpack.c.bf16 %v438, %v437
  %v453 = vpack.c.bf16 %v440, %v439
  %v454 = vpack.c.bf16 %v441, %v441
  %v468 = vunpack.c.l.b16 %v442
  %v469 = vunpack.c.h.b16 %v442
  %v470 = vunpack.c.l.b16 %v443
  %v471 = vunpack.c.h.b16 %v443
  %v472 = vunpack.c.l.b16 %v444
  %v473 = vunpack.c.h.b16 %v444
  %v474 = vunpack.c.l.b16 %v445
  %v475 = vunpack.c.h.b16 %v445
  %v476 = vunpack.c.l.b16 %v446
  %v477 = vunpack.c.h.b16 %v446
  %v478 = vunpack.c.l.b16 %v447
  %v479 = vunpack.c.h.b16 %v447
  %v480 = vunpack.c.l.b16 %v448
  %v481 = vunpack.c.h.b16 %v448
  %v482 = vunpack.c.l.b16 %v449
  %v483 = vunpack.c.h.b16 %v449
  %v484 = vunpack.c.l.b16 %v450
  %v485 = vunpack.c.h.b16 %v450
  %v486 = vunpack.c.l.b16 %v451
  %v487 = vunpack.c.h.b16 %v451
  %v488 = vunpack.c.l.b16 %v452
  %v489 = vunpack.c.h.b16 %v452
  %v490 = vunpack.c.l.b16 %v453
  %v491 = vunpack.c.h.b16 %v453
  %v492 = vunpack.c.l.b16 %v454
  %v493 = vpack.c.b16 %v468, %v468
  %v494 = vpack.c.b16 %v469, %v469
  %v495 = vpack.c.b16 %v470, %v470
  %v496 = vpack.c.b16 %v471, %v471
  %v497 = vpack.c.b16 %v472, %v472
  %v498 = vpack.c.b16 %v473, %v473
  %v499 = vpack.c.b16 %v474, %v474
  %v500 = vpack.c.b16 %v475, %v475
  %v501 = vpack.c.b16 %v476, %v476
  %v502 = vpack.c.b16 %v477, %v477
  %v503 = vpack.c.b16 %v478, %v478
  %v504 = vpack.c.b16 %v479, %v479
  %v505 = vpack.c.b16 %v480, %v480
  %v506 = vpack.c.b16 %v481, %v481
  %v507 = vpack.c.b16 %v482, %v482
  %v508 = vpack.c.b16 %v483, %v483
  %v509 = vpack.c.b16 %v484, %v484
  %v510 = vpack.c.b16 %v485, %v485
  %v511 = vpack.c.b16 %v486, %v486
  %v512 = vpack.c.b16 %v487, %v487
  %v513 = vpack.c.b16 %v488, %v488
  %v514 = vpack.c.b16 %v489, %v489
  %v515 = vpack.c.b16 %v490, %v490
  %v516 = vpack.c.b16 %v491, %v491
  %v517 = vpack.c.b16 %v492, %v492
  %543 = vst [vmem:[%s3] sm:$0xf] %v493
  %544 = vst [vmem:[%s3 + $0x4] sm:$0xf] %v494
  %545 = vst [vmem:[%s3 + $0x8] sm:$0xf] %v495
  %546 = vst [vmem:[%s3 + $0xc] sm:$0xf] %v496
  %547 = vst [vmem:[%s3 + $0x10] sm:$0xf] %v497
  %548 = vst [vmem:[%s3 + $0x14] sm:$0xf] %v498
  %549 = vst [vmem:[%s3 + $0x18] sm:$0xf] %v499
  %550 = vst [vmem:[%s3 + $0x1c] sm:$0xf] %v500
  %551 = vst [vmem:[%s3 + $0x20] sm:$0xf] %v501
  %552 = vst [vmem:[%s3 + $0x24] sm:$0xf] %v502
  %553 = vst [vmem:[%s3 + $0x28] sm:$0xf] %v503
  %554 = vst [vmem:[%s3 + $0x2c] sm:$0xf] %v504
  %555 = vst [vmem:[%s3 + $0x30] sm:$0xf] %v505
  %556 = vst [vmem:[%s3 + $0x34] sm:$0xf] %v506
  %557 = vst [vmem:[%s3 + $0x38] sm:$0xf] %v507
  %558 = vst [vmem:[%s3 + $0x3c] sm:$0xf] %v508
  %559 = vst [vmem:[%s3 + $0x40] sm:$0xf] %v509
  %560 = vst [vmem:[%s3 + $0x44] sm:$0xf] %v510
  %561 = vst [vmem:[%s3 + $0x48] sm:$0xf] %v511
  %562 = vst [vmem:[%s3 + $0x4c] sm:$0xf] %v512
  %563 = vst [vmem:[%s3 + $0x50] sm:$0xf] %v513
  %564 = vst [vmem:[%s3 + $0x54] sm:$0xf] %v514
  %565 = vst [vmem:[%s3 + $0x58] sm:$0xf] %v515
  %566 = vst [vmem:[%s3 + $0x5c] sm:$0xf] %v516
  %567 = vst [vmem:[%s3 + $0x60] sm:$0xf] %v517
  // Predicated region
  $region14: #{trashnet_forward.7} parent=0 // pred_check
    _
  $region15: #{trashnet_forward.7} parent=0 // pred_check_branch
    %569 = sbr.rel (0) target = $region17
  $region16: #{trashnet_forward.7} parent=0 // pred_region
    _
  $region17: #{trashnet_forward.7} parent=0 // pred_fallthru
    _
  // Predicated region
  $region18: #{trashnet_forward.7} parent=0 // pred_check
    _
  $region19: #{trashnet_forward.7} parent=0 // pred_check_branch
    %571 = sbr.rel (0) target = $region21
  $region20: #{trashnet_forward.7} parent=0 // pred_region
    _
  $region21: #{trashnet_forward.7} parent=0 // pred_fallthru
    _

// kernel: trashnet_forward.8
$region0: #{trashnet_forward.8}
  #allocation0 [shape = 'u32[]', space=smem, size = 0x4, offset = 0x4, fixed_abs, tag = 'smem constant byte address 0x4 - core index']
  #allocation1 [shape = 'u32[144,128]{1,0:T(1,128)}', space=vmem, size = 0x12000, scoped, tag = 'internal scratch']
  %s0 = inlined_call_operand.vmem [shape: bf16[2,5,2,5,256], index: 0, kind: input, shape index: {}]
  %s1 = inlined_call_operand.vmem [shape: bf16[2,5,5,128], index: 1, kind: output, shape index: {}]
  %s2 = sld [smem:[#allocation0]]
  $region37: #{trashnet_forward.8} parent=0
    _
  %s4 = ssub.s32 1, %s2
  %s5 = scalar_select 0, %s4, %s2
  loop: start=0, step=1, limit=4
  $region2: #{trashnet_forward.8} parent=0 // loop_pre_header
    _
  $region3: #{trashnet_forward.8} parent=0 // loop_header
    %s7 = sphi 0, %s11
    %p8 = scmp.ge.s32.totalorder %s7, 4
    %s17 = sphi 0, %s19
    %s20 = sphi 0, %s17
    %s21 = sphi 0, %s20
    %s37 = sphi 0, %s21
    %s43 = sphi 0, %s45
    %s46 = sphi 0, %s43
    %s47 = sphi 0, %s46
    %s63 = sphi 0, %s47
  $region4: #{trashnet_forward.8} parent=0 // loop_header_branch
    %10 = sbr.rel (%p8) target = $region8
  $region5: #{trashnet_forward.8} parent=0 // loop_body
    %s12 = ssub.s32 %s7, 1
    %s13 = ssub.s32 %s7, 2
    %s14 = sadd.s32 %s7, 1
    %s15 = ssub.s32 %s7, %s14
    %p16 = scmp.eq.s32.totalorder %s15, 0
    %s18 = sadd.s32 %s17, 1
    %s19 = scalar_select %p16, %s17, %s18
    %p22 = pneg %p16
    %p23 = scmp.eq.s32.totalorder %s7, 1
    %p24 = por %p22, %p23
    %p25 = scmp.ne.s32.totalorder %s17, %s20
    %p26 = scmp.eq.s32.totalorder %s7, 0
    %p27 = por %p25, %p26
    %p28 = scmp.ne.s32.totalorder %s17, %s20
    %p29 = scmp.eq.s32.totalorder %s12, 1
    %p30 = por %p28, %p29
    %p31 = scmp.ne.s32.totalorder %s20, %s21
    %p32 = scmp.eq.s32.totalorder %s12, 0
    %p33 = por %p31, %p32
    %p34 = scmp.ne.s32.totalorder %s20, %s21
    %p35 = scmp.eq.s32.totalorder %s13, 1
    %p36 = por %p34, %p35
    %p38 = scmp.ne.s32.totalorder %s21, %s37
    %p39 = scmp.eq.s32.totalorder %s13, 0
    %p40 = por %p38, %p39
    %s41 = ssub.s32 %s7, %s14
    %p42 = scmp.eq.s32.totalorder %s41, 0
    %s44 = sadd.s32 %s43, 1
    %s45 = scalar_select %p42, %s43, %s44
    %p48 = pneg %p42
    %p49 = scmp.eq.s32.totalorder %s7, 1
    %p50 = por %p48, %p49
    %p51 = scmp.ne.s32.totalorder %s43, %s46
    %p52 = scmp.eq.s32.totalorder %s7, 0
    %p53 = por %p51, %p52
    %p54 = scmp.ne.s32.totalorder %s43, %s46
    %p55 = scmp.eq.s32.totalorder %s12, 1
    %p56 = por %p54, %p55
    %p57 = scmp.ne.s32.totalorder %s46, %s47
    %p58 = scmp.eq.s32.totalorder %s12, 0
    %p59 = por %p57, %p58
    %p60 = scmp.ne.s32.totalorder %s46, %s47
    %p61 = scmp.eq.s32.totalorder %s13, 1
    %p62 = por %p60, %p61
    %p64 = scmp.ne.s32.totalorder %s47, %s63
    %p65 = scmp.eq.s32.totalorder %s13, 0
    %p66 = por %p64, %p65
    %p67 = scmp.le.s32.totalorder 1, %s7
    %p68 = scmp.lt.s32.totalorder %s7, 3
    %p69 = pnand %p67, %p68
    %p70 = pneg %p69
    // Predicated region
    $region9: #{trashnet_forward.8} parent=5 // pred_check
      _
    $region10: #{trashnet_forward.8} parent=5 // pred_check_branch
      %72 = sbr.rel (%p69) target = $region12
    $region11: #{trashnet_forward.8} parent=5 // pred_region
      %s73 = ssub.s32 %s7, 1
    $region12: #{trashnet_forward.8} parent=5 // pred_fallthru
      _
    %p74 = scmp.lt.s32.totalorder %s7, 2
    // Predicated region
    $region13: #{trashnet_forward.8} parent=5 // pred_check
      %p75 = pneg %p74
    $region14: #{trashnet_forward.8} parent=5 // pred_check_branch
      %77 = sbr.rel (%p75) target = $region16
    $region15: #{trashnet_forward.8} parent=5 // pred_region
      // Predicated region
      $region17: #{trashnet_forward.8} parent=15 // pred_check
        %p78 = pneg %p27
      $region18: #{trashnet_forward.8} parent=15 // pred_check_branch
        %80 = sbr.rel (%p78) target = $region20
      $region19: #{trashnet_forward.8} parent=15 // pred_region
        %p81 = scmp.lt.s32.totalorder %s7, 1
        %s82 = scalar_select %p81, %s7, 1
        %s83 = smul.addr %s82, 20
        %s84 = smul.addr %s83, 4
        %s85 = scalar_lea.vmem %s0, %s84
      $region20: #{trashnet_forward.8} parent=15 // pred_fallthru
        _
    $region16: #{trashnet_forward.8} parent=5 // pred_fallthru
      _
    %p86 = scmp.le.s32.totalorder 1, %s7
    %p87 = scmp.lt.s32.totalorder %s7, 3
    %p88 = pnand %p86, %p87
    %p89 = pneg %p88
    // Predicated region
    $region21: #{trashnet_forward.8} parent=5 // pred_check
      _
    $region22: #{trashnet_forward.8} parent=5 // pred_check_branch
      %91 = sbr.rel (%p88) target = $region24
    $region23: #{trashnet_forward.8} parent=5 // pred_region
      %s92 = ssub.s32 %s7, 1
      %p93 = scmp.lt.s32.totalorder %s12, 1
      %s94 = scalar_select %p93, %s12, 1
      %s95 = smul.addr %s94, 20
      %s96 = smul.addr %s95, 4
      %s97 = scalar_lea.vmem %s0, %s96
      %p98 = pneg %p33
      %p99 = pneg %p30
      %p100 = pneg %p59
      %p101 = pneg %p56
      %p102 = scmp.lt.s32.totalorder %s12, 1
      %s103 = scalar_select %p102, %s12, 1
      %s104 = smul.addr %s103, 5
      %s105 = smul.addr %s104, 4
      %s106 = scalar_lea.vmem %s1, %s105
      %p107 = scmp.lt.s32.totalorder %s12, 1
      %s108 = scalar_select %p107, %s12, 1
      %s109 = smul.addr %s108, 20
      %s110 = smul.addr %s109, 4
      %s111 = scalar_lea.vmem %s0, %s110
      %p112 = scmp.lt.s32.totalorder %s12, 1
      %s113 = scalar_select %p112, %s12, 1
      %s114 = smul.addr %s113, 5
      %s115 = smul.addr %s114, 4
      %s116 = scalar_lea.vmem %s1, %s115
      %v117 = vld [vmem:[%s111] sm:$0x77]
      %v118 = vld [vmem:[%s111 + $0x8] sm:$0x77]
      %v119 = vld [vmem:[%s111 + $0x10] sm:$0x77]
      %v120 = vld [vmem:[%s111 + $0x18] sm:$0x77]
      %v121 = vld [vmem:[%s111 + $0x20] sm:$0x77]
      %v122 = vld [vmem:[%s111 + $0x28] sm:$0x77]
      %v123 = vld [vmem:[%s111 + $0x30] sm:$0x77]
      %v124 = vld [vmem:[%s111 + $0x38] sm:$0x77]
      %v125 = vld [vmem:[%s111 + $0x40] sm:$0x77]
      %v126 = vld [vmem:[%s111 + $0x48] sm:$0x77]
      %v127 = vmax.bf16 %v117, %v118
      %v128 = vmax.bf16 %v119, %v120
      %v129 = vmax.bf16 %v121, %v122
      %v130 = vmax.bf16 %v123, %v124
      %v131 = vmax.bf16 %v125, %v126
      %v137 = vrot.slane %v127, 4
      %v138 = vrot.slane %v128, 4
      %v139 = vrot.slane %v129, 4
      %v140 = vrot.slane %v130, 4
      %v141 = vrot.slane %v131, 4
      %v147 = vmax.bf16 %v127, %v137
      %v148 = vmax.bf16 %v128, %v138
      %v149 = vmax.bf16 %v129, %v139
      %v150 = vmax.bf16 %v130, %v140
      %v151 = vmax.bf16 %v131, %v141
      %vm152 = vcmask 1042432
      %vm153 = vsmask.f32 2304
      %vm154 = vmand %vm152, %vm153
      %v155 = vld [vmem:[%s116] sm:$0x7]
      %v156 = vsel %vm154, %v147, %v155
      %157 = vst [vmem:[%s116] sm:$0x7] %v156
      %v158 = vld [vmem:[%s116 + $0x4] sm:$0x7]
      %v159 = vsel %vm154, %v148, %v158
      %160 = vst [vmem:[%s116 + $0x4] sm:$0x7] %v159
      %v161 = vld [vmem:[%s116 + $0x8] sm:$0x7]
      %v162 = vsel %vm154, %v149, %v161
      %163 = vst [vmem:[%s116 + $0x8] sm:$0x7] %v162
      %v164 = vld [vmem:[%s116 + $0xc] sm:$0x7]
      %v165 = vsel %vm154, %v150, %v164
      %166 = vst [vmem:[%s116 + $0xc] sm:$0x7] %v165
      %v167 = vld [vmem:[%s116 + $0x10] sm:$0x7]
      %v168 = vsel %vm154, %v151, %v167
      %169 = vst [vmem:[%s116 + $0x10] sm:$0x7] %v168
      %p170 = scmp.lt.s32.totalorder %s12, 1
      %s171 = scalar_select %p170, %s12, 1
      %s172 = smul.addr %s171, 5
      %s173 = smul.addr %s172, 4
      %s174 = scalar_lea.vmem %s1, %s173
      // Predicated region
      $region25: #{trashnet_forward.8} parent=23 // pred_check
        %p175 = pneg %p56
      $region26: #{trashnet_forward.8} parent=23 // pred_check_branch
        %177 = sbr.rel (%p175) target = $region28
      $region27: #{trashnet_forward.8} parent=23 // pred_region
        _
      $region28: #{trashnet_forward.8} parent=23 // pred_fallthru
        _
    $region24: #{trashnet_forward.8} parent=5 // pred_fallthru
      _
    %p178 = scmp.le.s32.totalorder 2, %s7
    // Predicated region
    $region29: #{trashnet_forward.8} parent=5 // pred_check
      %p179 = pneg %p178
    $region30: #{trashnet_forward.8} parent=5 // pred_check_branch
      %181 = sbr.rel (%p179) target = $region32
    $region31: #{trashnet_forward.8} parent=5 // pred_region
      %s182 = ssub.s32 %s7, 2
      // Predicated region
      $region33: #{trashnet_forward.8} parent=31 // pred_check
        %p183 = pneg %p62
      $region34: #{trashnet_forward.8} parent=31 // pred_check_branch
        %185 = sbr.rel (%p183) target = $region36
      $region35: #{trashnet_forward.8} parent=31 // pred_region
        %p186 = scmp.lt.s32.totalorder %s13, 1
        %s187 = scalar_select %p186, %s13, 1
        %s188 = smul.addr %s187, 5
        %s189 = smul.addr %s188, 4
        %s190 = scalar_lea.vmem %s1, %s189
      $region36: #{trashnet_forward.8} parent=31 // pred_fallthru
        _
    $region32: #{trashnet_forward.8} parent=5 // pred_fallthru
      _
  $region6: #{trashnet_forward.8} parent=0 // loop_footer
    %s11 = sadd.s32 1, %s7
  $region7: #{trashnet_forward.8} parent=0 // loop_footer_branch
    %6 = sbr.rel target = $region3
  $region8: #{trashnet_forward.8} parent=0 // loop_exit
    _

// kernel: trashnet_forward.9
$region0: #{trashnet_forward.9}
  #allocation0 [shape = 'u32[]', space=smem, size = 0x4, offset = 0x4, fixed_abs, tag = 'smem constant byte address 0x4 - core index']
  #allocation1 [shape = 'u32[144,128]{1,0:T(1,128)}', space=vmem, size = 0x12000, scoped, tag = 'internal scratch']
  %s0 = inlined_call_operand.vmem [shape: bf16[8,400], index: 0, kind: input, shape index: {}]
  %s1 = inlined_call_operand.vmem [shape: bf16[400,128], index: 1, kind: input, shape index: {}]
  %s2 = inlined_call_operand.vmem [shape: f32[1,128], index: 2, kind: input, shape index: {}]
  %s3 = inlined_call_operand.vmem [shape: bf16[128,128], index: 3, kind: input, shape index: {}]
  %s4 = inlined_call_operand.vmem [shape: f32[1,128], index: 4, kind: input, shape index: {}]
  %s5 = inlined_call_operand.vmem [shape: bf16[128,128], index: 5, kind: input, shape index: {}]
  %s6 = inlined_call_operand.vmem [shape: f32[1,128], index: 6, kind: input, shape index: {}]
  %s7 = inlined_call_operand.vmem [shape: f32[8,128], index: 7, kind: output, shape index: {}]
  %s8 = sld [smem:[#allocation0]]
  $region38: #{trashnet_forward.9} parent=0
    _
  %s10 = ssub.s32 1, %s8
  %s11 = scalar_select 0, %s10, %s8
  // Predicated region
  $region2: #{trashnet_forward.9} parent=0 // pred_check
    _
  $region3: #{trashnet_forward.9} parent=0 // pred_check_branch
    %13 = sbr.rel (0) target = $region5
  $region4: #{trashnet_forward.9} parent=0 // pred_region
    _
  $region5: #{trashnet_forward.9} parent=0 // pred_fallthru
    _
  // Predicated region
  $region6: #{trashnet_forward.9} parent=0 // pred_check
    _
  $region7: #{trashnet_forward.9} parent=0 // pred_check_branch
    %15 = sbr.rel (0) target = $region9
  $region8: #{trashnet_forward.9} parent=0 // pred_region
    _
  $region9: #{trashnet_forward.9} parent=0 // pred_fallthru
    _
  // Predicated region
  $region10: #{trashnet_forward.9} parent=0 // pred_check
    _
  $region11: #{trashnet_forward.9} parent=0 // pred_check_branch
    %17 = sbr.rel (0) target = $region13
  $region12: #{trashnet_forward.9} parent=0 // pred_region
    _
  $region13: #{trashnet_forward.9} parent=0 // pred_fallthru
    _
  // Predicated region
  $region14: #{trashnet_forward.9} parent=0 // pred_check
    _
  $region15: #{trashnet_forward.9} parent=0 // pred_check_branch
    %19 = sbr.rel (0) target = $region17
  $region16: #{trashnet_forward.9} parent=0 // pred_region
    _
  $region17: #{trashnet_forward.9} parent=0 // pred_fallthru
    _
  // Predicated region
  $region18: #{trashnet_forward.9} parent=0 // pred_check
    _
  $region19: #{trashnet_forward.9} parent=0 // pred_check_branch
    %21 = sbr.rel (0) target = $region21
  $region20: #{trashnet_forward.9} parent=0 // pred_region
    _
  $region21: #{trashnet_forward.9} parent=0 // pred_fallthru
    _
  // Predicated region
  $region22: #{trashnet_forward.9} parent=0 // pred_check
    _
  $region23: #{trashnet_forward.9} parent=0 // pred_check_branch
    %23 = sbr.rel (0) target = $region25
  $region24: #{trashnet_forward.9} parent=0 // pred_region
    _
  $region25: #{trashnet_forward.9} parent=0 // pred_fallthru
    _
  // Predicated region
  $region26: #{trashnet_forward.9} parent=0 // pred_check
    _
  $region27: #{trashnet_forward.9} parent=0 // pred_check_branch
    %25 = sbr.rel (0) target = $region29
  $region28: #{trashnet_forward.9} parent=0 // pred_region
    _
  $region29: #{trashnet_forward.9} parent=0 // pred_fallthru
    _
  %v27 = vld [vmem:[%s0] sm:$0xff]
  %v28 = vld [vmem:[%s0 + $0x8] sm:$0xff]
  %v29 = vld [vmem:[%s1] sm:$0xf]
  %v30 = vld [vmem:[%s1 + $0x4] sm:$0xf]
  %v31 = vld [vmem:[%s1 + $0x8] sm:$0xf]
  %v32 = vld [vmem:[%s1 + $0xc] sm:$0xf]
  %v33 = vld [vmem:[%s1 + $0x10] sm:$0xf]
  %v34 = vld [vmem:[%s1 + $0x14] sm:$0xf]
  %v35 = vld [vmem:[%s1 + $0x18] sm:$0xf]
  %v36 = vld [vmem:[%s1 + $0x1c] sm:$0xf]
  %v37 = vld [vmem:[%s1 + $0x20] sm:$0xf]
  %v38 = vld [vmem:[%s1 + $0x24] sm:$0xf]
  %v39 = vld [vmem:[%s1 + $0x28] sm:$0xf]
  %v40 = vld [vmem:[%s1 + $0x2c] sm:$0xf]
  %v41 = vld [vmem:[%s1 + $0x30] sm:$0xf]
  %v42 = vld [vmem:[%s1 + $0x34] sm:$0xf]
  %v43 = vld [vmem:[%s1 + $0x38] sm:$0xf]
  %v44 = vld [vmem:[%s1 + $0x3c] sm:$0xf]
  %v45 = vld [vmem:[%s1 + $0x40] sm:$0xf]
  %v46 = vld [vmem:[%s1 + $0x44] sm:$0xf]
  %v47 = vld [vmem:[%s1 + $0x48] sm:$0xf]
  %v48 = vld [vmem:[%s1 + $0x4c] sm:$0xf]
  %v49 = vld [vmem:[%s1 + $0x50] sm:$0xf]
  %v50 = vld [vmem:[%s1 + $0x54] sm:$0xf]
  %v51 = vld [vmem:[%s1 + $0x58] sm:$0xf]
  %v52 = vld [vmem:[%s1 + $0x5c] sm:$0xf]
  %v53 = vld [vmem:[%s1 + $0x60] sm:$0xf]
  %v54 = vld [vmem:[%s1 + $0x64] sm:$0xf]
  %v55 = vld [vmem:[%s1 + $0x68] sm:$0xf]
  %v56 = vld [vmem:[%s1 + $0x6c] sm:$0xf]
  %v57 = vld [vmem:[%s1 + $0x70] sm:$0xf]
  %v58 = vld [vmem:[%s1 + $0x74] sm:$0xf]
  %v59 = vld [vmem:[%s1 + $0x78] sm:$0xf]
  %v60 = vld [vmem:[%s1 + $0x7c] sm:$0xf]
  %v61 = vld [vmem:[%s1 + $0x80] sm:$0xf]
  %v62 = vld [vmem:[%s1 + $0x84] sm:$0xf]
  %v63 = vld [vmem:[%s1 + $0x88] sm:$0xf]
  %v64 = vld [vmem:[%s1 + $0x8c] sm:$0xf]
  %v65 = vld [vmem:[%s1 + $0x90] sm:$0xf]
  %v66 = vld [vmem:[%s1 + $0x94] sm:$0xf]
  %v67 = vld [vmem:[%s1 + $0x98] sm:$0xf]
  %v68 = vld [vmem:[%s1 + $0x9c] sm:$0xf]
  %v69 = vld [vmem:[%s1 + $0xa0] sm:$0xf]
  %v70 = vld [vmem:[%s1 + $0xa4] sm:$0xf]
  %v71 = vld [vmem:[%s1 + $0xa8] sm:$0xf]
  %v72 = vld [vmem:[%s1 + $0xac] sm:$0xf]
  %v73 = vld [vmem:[%s1 + $0xb0] sm:$0xf]
  %v74 = vld [vmem:[%s1 + $0xb4] sm:$0xf]
  %v75 = vld [vmem:[%s1 + $0xb8] sm:$0xf]
  %v76 = vld [vmem:[%s1 + $0xbc] sm:$0xf]
  %v77 = vld [vmem:[%s1 + $0xc0] sm:$0xf]
  %v78 = vld [vmem:[%s1 + $0xc4] sm:$0xf]
  %v79 = vld [vmem:[%s2] sm:$0x1]
  %v81 = vlaneseq
  %v82 = vshrl.u32 %v81, 7
  %v83 = vsub.s32 0, %v82
  %v84 = vrot.slane %v79, %v83
  %v88 = vunpack.c.l.b16 %v27
  %v89 = vunpack.c.h.b16 %v27
  %v90 = vunpack.c.l.b16 %v28
  %v91 = vunpack.c.h.b16 %v28
  %v92 = vpack.c.b16 %v88, %v88
  %v93 = vpack.c.b16 %v89, %v89
  %v94 = vpack.c.b16 %v90, %v90
  %v95 = vpack.c.b16 %v91, %v91
  %v149 = vunpack.c.l.b16 %v29
  %v150 = vunpack.c.l.b16 %v30
  %v151 = vunpack.c.l.b16 %v31
  %v152 = vunpack.c.l.b16 %v32
  %v153 = vunpack.c.l.b16 %v33
  %v154 = vunpack.c.l.b16 %v34
  %v155 = vunpack.c.l.b16 %v35
  %v156 = vunpack.c.l.b16 %v36
  %v157 = vunpack.c.l.b16 %v37
  %v158 = vunpack.c.l.b16 %v38
  %v159 = vunpack.c.l.b16 %v39
  %v160 = vunpack.c.l.b16 %v40
  %v161 = vunpack.c.l.b16 %v41
  %v162 = vunpack.c.l.b16 %v42
  %v163 = vunpack.c.l.b16 %v43
  %v164 = vunpack.c.l.b16 %v44
  %v165 = vunpack.c.l.b16 %v45
  %v166 = vunpack.c.l.b16 %v46
  %v167 = vunpack.c.l.b16 %v47
  %v168 = vunpack.c.l.b16 %v48
  %v169 = vunpack.c.l.b16 %v49
  %v170 = vunpack.c.l.b16 %v50
  %v171 = vunpack.c.l.b16 %v51
  %v172 = vunpack.c.l.b16 %v52
  %v173 = vunpack.c.l.b16 %v53
  %v174 = vunpack.c.l.b16 %v54
  %v175 = vunpack.c.l.b16 %v55
  %v176 = vunpack.c.l.b16 %v56
  %v177 = vunpack.c.l.b16 %v57
  %v178 = vunpack.c.l.b16 %v58
  %v179 = vunpack.c.l.b16 %v59
  %v180 = vunpack.c.l.b16 %v60
  %v181 = vunpack.c.l.b16 %v61
  %v182 = vunpack.c.l.b16 %v62
  %v183 = vunpack.c.l.b16 %v63
  %v184 = vunpack.c.l.b16 %v64
  %v185 = vunpack.c.l.b16 %v65
  %v186 = vunpack.c.l.b16 %v66
  %v187 = vunpack.c.l.b16 %v67
  %v188 = vunpack.c.l.b16 %v68
  %v189 = vunpack.c.l.b16 %v69
  %v190 = vunpack.c.l.b16 %v70
  %v191 = vunpack.c.l.b16 %v71
  %v192 = vunpack.c.l.b16 %v72
  %v193 = vunpack.c.l.b16 %v73
  %v194 = vunpack.c.l.b16 %v74
  %v195 = vunpack.c.l.b16 %v75
  %v196 = vunpack.c.l.b16 %v76
  %v197 = vunpack.c.l.b16 %v77
  %v198 = vunpack.c.l.b16 %v78
  %v199 = vpack.c.b16 %v150, %v149
  %v200 = vpack.c.b16 %v152, %v151
  %v201 = vpack.c.b16 %v154, %v153
  %v202 = vpack.c.b16 %v156, %v155
  %v203 = vpack.c.b16 %v158, %v157
  %v204 = vpack.c.b16 %v160, %v159
  %v205 = vpack.c.b16 %v162, %v161
  %v206 = vpack.c.b16 %v164, %v163
  %v207 = vpack.c.b16 %v166, %v165
  %v208 = vpack.c.b16 %v168, %v167
  %v209 = vpack.c.b16 %v170, %v169
  %v210 = vpack.c.b16 %v172, %v171
  %v211 = vpack.c.b16 %v174, %v173
  %v212 = vpack.c.b16 %v176, %v175
  %v213 = vpack.c.b16 %v178, %v177
  %v214 = vpack.c.b16 %v180, %v179
  %v215 = vpack.c.b16 %v182, %v181
  %v216 = vpack.c.b16 %v184, %v183
  %v217 = vpack.c.b16 %v186, %v185
  %v218 = vpack.c.b16 %v188, %v187
  %v219 = vpack.c.b16 %v190, %v189
  %v220 = vpack.c.b16 %v192, %v191
  %v221 = vpack.c.b16 %v194, %v193
  %v222 = vpack.c.b16 %v196, %v195
  %v223 = vpack.c.b16 %v198, %v197
  %vm249 = vcmask 130048
  %v251 = vsel %vm249, %v95, 0
  %253 = vmatprep.subr.bf16.mxu0 0
  %254 = vmatpush1.bf16.msra.mxu0 %v199
  %255 = vmatprep.subr.bf16.mxu0 0
  %256 = vmatpush1.bf16.msra.mxu0 %v200
  %257 = vmatprep.subr.bf16.mxu0 0
  %258 = vmatpush1.bf16.msra.mxu0 %v201
  %259 = vmatprep.subr.bf16.mxu0 0
  %260 = vmatpush1.bf16.msra.mxu0 %v202
  %261 = vmatprep.subr.bf16.mxu0 0
  %262 = vmatpush1.bf16.msra.mxu0 %v203
  %263 = vmatprep.subr.bf16.mxu0 0
  %264 = vmatpush1.bf16.msra.mxu0 %v204
  %265 = vmatprep.subr.bf16.mxu0 0
  %266 = vmatpush1.bf16.msra.mxu0 %v205
  %267 = vmatprep.subr.bf16.mxu0 0
  %268 = vmatpush1.bf16.msra.mxu0 %v206
  %269 = vmatprep.subr.bf16.mxu0 0
  %270 = vmatpush1.bf16.msra.mxu0 %v207
  %271 = vmatprep.subr.bf16.mxu0 0
  %272 = vmatpush1.bf16.msra.mxu0 %v208
  %273 = vmatprep.subr.bf16.mxu0 0
  %274 = vmatpush1.bf16.msra.mxu0 %v209
  %275 = vmatprep.subr.bf16.mxu0 0
  %276 = vmatpush1.bf16.msra.mxu0 %v210
  %277 = vmatprep.subr.bf16.mxu0 0
  %278 = vmatpush1.bf16.msra.mxu0 %v211
  %279 = vmatprep.subr.bf16.mxu0 0
  %280 = vmatpush1.bf16.msra.mxu0 %v212
  %281 = vmatprep.subr.bf16.mxu0 0
  %282 = vmatpush1.bf16.msra.mxu0 %v213
  %283 = vmatprep.subr.bf16.mxu0 0
  %284 = vmatpush1.bf16.msra.mxu0 %v214
  %285 = vmatprep.mubr.bf16.mxu0 %v93
  %286 = vmatmul.mubr.bf16.gmra.mrb[0].mxu0 %v92
  %v287 = vpop.f32.mrb[0].mxu0
  %v288 = vadd.f32 %v84, %v287
  %v289 = vpop.f32.mrb[0].mxu0
  %v290 = vpop.f32.mrb[0].mxu0
  %v291 = vpop.f32.mrb[0].mxu0
  %292 = vdwg.mxu0
  %293 = vmatprep.subr.bf16.mxu0 0
  %294 = vmatpush1.bf16.msra.mxu0 %v215
  %295 = vmatprep.subr.bf16.mxu0 0
  %296 = vmatpush1.bf16.msra.mxu0 %v216
  %297 = vmatprep.subr.bf16.mxu0 0
  %298 = vmatpush1.bf16.msra.mxu0 %v217
  %299 = vmatprep.subr.bf16.mxu0 0
  %300 = vmatpush1.bf16.msra.mxu0 %v218
  %301 = vmatprep.subr.bf16.mxu0 0
  %302 = vmatpush1.bf16.msra.mxu0 %v219
  %303 = vmatprep.subr.bf16.mxu0 0
  %304 = vmatpush1.bf16.msra.mxu0 %v220
  %305 = vmatprep.subr.bf16.mxu0 0
  %306 = vmatpush1.bf16.msra.mxu0 %v221
  %307 = vmatprep.subr.bf16.mxu0 0
  %308 = vmatpush1.bf16.msra.mxu0 %v222
  %309 = vmatprep.subr.bf16.mxu0 0
  %310 = vmatpush1.bf16.msra.mxu0 %v223
  %311 = vmatprep.subr.bf16.mxu0 0
  %312 = vmatpush1.bf16.msra.mxu0 0
  %313 = vmatprep.subr.bf16.mxu0 0
  %314 = vmatpush1.bf16.msra.mxu0 0
  %315 = vmatprep.subr.bf16.mxu0 0
  %316 = vmatpush1.bf16.msra.mxu0 0
  %317 = vmatprep.subr.bf16.mxu0 0
  %318 = vmatpush1.bf16.msra.mxu0 0
  %319 = vmatprep.subr.bf16.mxu0 0
  %320 = vmatpush1.bf16.msra.mxu0 0
  %321 = vmatprep.subr.bf16.mxu0 0
  %322 = vmatpush1.bf16.msra.mxu0 0
  %323 = vmatprep.subr.bf16.mxu0 0
  %324 = vmatpush1.bf16.msra.mxu0 0
  %325 = vmatprep.mubr.bf16.mxu0 %v251
  %326 = vmatmul.mubr.bf16.gmra.mrb[0].mxu0 %v94
  %v327 = vpop.f32.mrb[0].mxu0
  %v328 = vadd.f32 %v288, %v327
  %v329 = vpop.f32.mrb[0].mxu0
  %v330 = vpop.f32.mrb[0].mxu0
  %v331 = vpop.f32.mrb[0].mxu0
  %332 = vdwg.mxu0
  %v333 = vmax.f32 %v328, 0.0
  %v334 = vpack.c.bf16 %v333, %v333
  %v335 = vld [vmem:[%s3] sm:$0xf]
  %v336 = vld [vmem:[%s3 + $0x4] sm:$0xf]
  %v337 = vld [vmem:[%s3 + $0x8] sm:$0xf]
  %v338 = vld [vmem:[%s3 + $0xc] sm:$0xf]
  %v339 = vld [vmem:[%s3 + $0x10] sm:$0xf]
  %v340 = vld [vmem:[%s3 + $0x14] sm:$0xf]
  %v341 = vld [vmem:[%s3 + $0x18] sm:$0xf]
  %v342 = vld [vmem:[%s3 + $0x1c] sm:$0xf]
  %v343 = vld [vmem:[%s3 + $0x20] sm:$0xf]
  %v344 = vld [vmem:[%s3 + $0x24] sm:$0xf]
  %v345 = vld [vmem:[%s3 + $0x28] sm:$0xf]
  %v346 = vld [vmem:[%s3 + $0x2c] sm:$0xf]
  %v347 = vld [vmem:[%s3 + $0x30] sm:$0xf]
  %v348 = vld [vmem:[%s3 + $0x34] sm:$0xf]
  %v349 = vld [vmem:[%s3 + $0x38] sm:$0xf]
  %v350 = vld [vmem:[%s3 + $0x3c] sm:$0xf]
  %v351 = vld [vmem:[%s4] sm:$0x1]
  %v353 = vlaneseq
  %v354 = vshrl.u32 %v353, 7
  %v355 = vsub.s32 0, %v354
  %v356 = vrot.slane %v351, %v355
  %v374 = vunpack.c.l.b16 %v335
  %v375 = vunpack.c.l.b16 %v336
  %v376 = vunpack.c.l.b16 %v337
  %v377 = vunpack.c.l.b16 %v338
  %v378 = vunpack.c.l.b16 %v339
  %v379 = vunpack.c.l.b16 %v340
  %v380 = vunpack.c.l.b16 %v341
  %v381 = vunpack.c.l.b16 %v342
  %v382 = vunpack.c.l.b16 %v343
  %v383 = vunpack.c.l.b16 %v344
  %v384 = vunpack.c.l.b16 %v345
  %v385 = vunpack.c.l.b16 %v346
  %v386 = vunpack.c.l.b16 %v347
  %v387 = vunpack.c.l.b16 %v348
  %v388 = vunpack.c.l.b16 %v349
  %v389 = vunpack.c.l.b16 %v350
  %v390 = vpack.c.b16 %v375, %v374
  %v391 = vpack.c.b16 %v377, %v376
  %v392 = vpack.c.b16 %v379, %v378
  %v393 = vpack.c.b16 %v381, %v380
  %v394 = vpack.c.b16 %v383, %v382
  %v395 = vpack.c.b16 %v385, %v384
  %v396 = vpack.c.b16 %v387, %v386
  %v397 = vpack.c.b16 %v389, %v388
  %406 = vmatprep.subr.bf16.mxu0 0
  %407 = vmatpush1.bf16.msra.mxu0 %v390
  %408 = vmatprep.subr.bf16.mxu0 0
  %409 = vmatpush1.bf16.msra.mxu0 %v391
  %410 = vmatprep.subr.bf16.mxu0 0
  %411 = vmatpush1.bf16.msra.mxu0 %v392
  %412 = vmatprep.subr.bf16.mxu0 0
  %413 = vmatpush1.bf16.msra.mxu0 %v393
  %414 = vmatprep.subr.bf16.mxu0 0
  %415 = vmatpush1.bf16.msra.mxu0 %v394
  %416 = vmatprep.subr.bf16.mxu0 0
  %417 = vmatpush1.bf16.msra.mxu0 %v395
  %418 = vmatprep.subr.bf16.mxu0 0
  %419 = vmatpush1.bf16.msra.mxu0 %v396
  %420 = vmatprep.subr.bf16.mxu0 0
  %421 = vmatpush1.bf16.msra.mxu0 %v397
  %422 = vmatprep.subr.bf16.mxu0 0
  %423 = vmatpush1.bf16.msra.mxu0 0
  %424 = vmatprep.subr.bf16.mxu0 0
  %425 = vmatpush1.bf16.msra.mxu0 0
  %426 = vmatprep.subr.bf16.mxu0 0
  %427 = vmatpush1.bf16.msra.mxu0 0
  %428 = vmatprep.subr.bf16.mxu0 0
  %429 = vmatpush1.bf16.msra.mxu0 0
  %430 = vmatprep.subr.bf16.mxu0 0
  %431 = vmatpush1.bf16.msra.mxu0 0
  %432 = vmatprep.subr.bf16.mxu0 0
  %433 = vmatpush1.bf16.msra.mxu0 0
  %434 = vmatprep.subr.bf16.mxu0 0
  %435 = vmatpush1.bf16.msra.mxu0 0
  %436 = vmatprep.subr.bf16.mxu0 0
  %437 = vmatpush1.bf16.msra.mxu0 0
  %438 = vmatprep.mubr.bf16.mxu0 0
  %439 = vmatmul.mubr.bf16.gmra.mrb[0].mxu0 %v334
  %v440 = vpop.f32.mrb[0].mxu0
  %v441 = vadd.f32 %v356, %v440
  %v442 = vpop.f32.mrb[0].mxu0
  %v443 = vpop.f32.mrb[0].mxu0
  %v444 = vpop.f32.mrb[0].mxu0
  %445 = vdwg.mxu0
  %v446 = vmax.f32 %v441, 0.0
  %v447 = vpack.c.bf16 %v446, %v446
  %v448 = vld [vmem:[%s5] sm:$0xf]
  %v449 = vld [vmem:[%s5 + $0x4] sm:$0xf]
  %v450 = vld [vmem:[%s5 + $0x8] sm:$0xf]
  %v451 = vld [vmem:[%s5 + $0xc] sm:$0xf]
  %v452 = vld [vmem:[%s5 + $0x10] sm:$0xf]
  %v453 = vld [vmem:[%s5 + $0x14] sm:$0xf]
  %v454 = vld [vmem:[%s5 + $0x18] sm:$0xf]
  %v455 = vld [vmem:[%s5 + $0x1c] sm:$0xf]
  %v456 = vld [vmem:[%s5 + $0x20] sm:$0xf]
  %v457 = vld [vmem:[%s5 + $0x24] sm:$0xf]
  %v458 = vld [vmem:[%s5 + $0x28] sm:$0xf]
  %v459 = vld [vmem:[%s5 + $0x2c] sm:$0xf]
  %v460 = vld [vmem:[%s5 + $0x30] sm:$0xf]
  %v461 = vld [vmem:[%s5 + $0x34] sm:$0xf]
  %v462 = vld [vmem:[%s5 + $0x38] sm:$0xf]
  %v463 = vld [vmem:[%s5 + $0x3c] sm:$0xf]
  %v464 = vld [vmem:[%s6] sm:$0x1]
  %v466 = vlaneseq
  %v467 = vshrl.u32 %v466, 7
  %v468 = vsub.s32 0, %v467
  %v469 = vrot.slane %v464, %v468
  %v487 = vunpack.c.l.b16 %v448
  %v488 = vunpack.c.l.b16 %v449
  %v489 = vunpack.c.l.b16 %v450
  %v490 = vunpack.c.l.b16 %v451
  %v491 = vunpack.c.l.b16 %v452
  %v492 = vunpack.c.l.b16 %v453
  %v493 = vunpack.c.l.b16 %v454
  %v494 = vunpack.c.l.b16 %v455
  %v495 = vunpack.c.l.b16 %v456
  %v496 = vunpack.c.l.b16 %v457
  %v497 = vunpack.c.l.b16 %v458
  %v498 = vunpack.c.l.b16 %v459
  %v499 = vunpack.c.l.b16 %v460
  %v500 = vunpack.c.l.b16 %v461
  %v501 = vunpack.c.l.b16 %v462
  %v502 = vunpack.c.l.b16 %v463
  %v503 = vpack.c.b16 %v488, %v487
  %v504 = vpack.c.b16 %v490, %v489
  %v505 = vpack.c.b16 %v492, %v491
  %v506 = vpack.c.b16 %v494, %v493
  %v507 = vpack.c.b16 %v496, %v495
  %v508 = vpack.c.b16 %v498, %v497
  %v509 = vpack.c.b16 %v500, %v499
  %v510 = vpack.c.b16 %v502, %v501
  %519 = vmatprep.subr.bf16.mxu0 0
  %520 = vmatpush1.bf16.msra.mxu0 %v503
  %521 = vmatprep.subr.bf16.mxu0 0
  %522 = vmatpush1.bf16.msra.mxu0 %v504
  %523 = vmatprep.subr.bf16.mxu0 0
  %524 = vmatpush1.bf16.msra.mxu0 %v505
  %525 = vmatprep.subr.bf16.mxu0 0
  %526 = vmatpush1.bf16.msra.mxu0 %v506
  %527 = vmatprep.subr.bf16.mxu0 0
  %528 = vmatpush1.bf16.msra.mxu0 %v507
  %529 = vmatprep.subr.bf16.mxu0 0
  %530 = vmatpush1.bf16.msra.mxu0 %v508
  %531 = vmatprep.subr.bf16.mxu0 0
  %532 = vmatpush1.bf16.msra.mxu0 %v509
  %533 = vmatprep.subr.bf16.mxu0 0
  %534 = vmatpush1.bf16.msra.mxu0 %v510
  %535 = vmatprep.subr.bf16.mxu0 0
  %536 = vmatpush1.bf16.msra.mxu0 0
  %537 = vmatprep.subr.bf16.mxu0 0
  %538 = vmatpush1.bf16.msra.mxu0 0
  %539 = vmatprep.subr.bf16.mxu0 0
  %540 = vmatpush1.bf16.msra.mxu0 0
  %541 = vmatprep.subr.bf16.mxu0 0
  %542 = vmatpush1.bf16.msra.mxu0 0
  %543 = vmatprep.subr.bf16.mxu0 0
  %544 = vmatpush1.bf16.msra.mxu0 0
  %545 = vmatprep.subr.bf16.mxu0 0
  %546 = vmatpush1.bf16.msra.mxu0 0
  %547 = vmatprep.subr.bf16.mxu0 0
  %548 = vmatpush1.bf16.msra.mxu0 0
  %549 = vmatprep.subr.bf16.mxu0 0
  %550 = vmatpush1.bf16.msra.mxu0 0
  %551 = vmatprep.mubr.bf16.mxu0 0
  %552 = vmatmul.mubr.bf16.gmra.mrb[0].mxu0 %v447
  %v553 = vpop.f32.mrb[0].mxu0
  %v554 = vadd.f32 %v469, %v553
  %v555 = vpop.f32.mrb[0].mxu0
  %v556 = vpop.f32.mrb[0].mxu0
  %v557 = vpop.f32.mrb[0].mxu0
  %558 = vdwg.mxu0
  %559 = vst [vmem:[%s7] sm:$0xff] %v554
  // Predicated region
  $region30: #{trashnet_forward.9} parent=0 // pred_check
    _
  $region31: #{trashnet_forward.9} parent=0 // pred_check_branch
    %561 = sbr.rel (0) target = $region33
  $region32: #{trashnet_forward.9} parent=0 // pred_region
    _
  $region33: #{trashnet_forward.9} parent=0 // pred_fallthru
    _
  // Predicated region
  $region34: #{trashnet_forward.9} parent=0 // pred_check
    _
  $region35: #{trashnet_forward.9} parent=0 // pred_check_branch
    %563 = sbr.rel (0) target = $region37
  $region36: #{trashnet_forward.9} parent=0 // pred_region
    _
  $region37: #{trashnet_forward.9} parent=0 // pred_fallthru
    _

</llo_original>
